<compile_context>
chip_gen: v7x
topology: tpu7x:2x2x1
jax: 0.10.0
libtpu: 0.0.40
codegen_flags: <defaults>
</compile_context>

<pallas_src>
import math
import functools

import jax
import jax.numpy as jnp
import numpy as np
from jax.experimental import pallas as pl
from jax.experimental.pallas import tpu as pltpu


def _mul_hint(v, m):
    """pl.multiple_of hint for traced scalars; pass-through for Python ints."""
    return v if isinstance(v, int) else pl.multiple_of(v, m)


# ---------------------------------------------------------------------------
# Pallas kernel: one full transformer Block for a tile of Bt batch elements,
# flattened to rows = Bt * N.
# ---------------------------------------------------------------------------
def _block_kernel(
    x_ref,                              # (rows, C)  input dtype (f32 here)
    ln1_w_ref, ln1_b_ref,               # (1, C) f32
    qkv_w_ref,                          # (C, 3C) bf16
    proj_w_ref, proj_b_ref,             # (C, C) bf16, (1, C) f32
    ln2_w_ref, ln2_b_ref,               # (1, C) f32
    fc1_w_ref, fc1_b_ref,               # (C, Hd) bf16, (1, Hd) f32
    fc2_w_ref, fc2_b_ref,               # (Hd, C) bf16, (1, C) f32
    out_ref,                            # (rows, C)
    qkv_sc,                             # (rows, 3C) bf16 scratch
    attn_sc,                            # (rows, C)  bf16 scratch
    *,
    num_heads: int,
    head_dim: int,
    seq_len: int,
    batch_tile: int,
    heads_per_group: int,
    mlp_chunk: int,
    eps: float,
    scale: float,
):
    rows, C = x_ref.shape
    N = seq_len
    hpg = heads_per_group
    gw = hpg * head_dim                       # group width (lanes)
    n_groups = num_heads // hpg

    def layernorm(v, w, b):
        mu = jnp.mean(v, axis=-1, keepdims=True)
        var = jnp.mean((v - mu) ** 2, axis=-1, keepdims=True)
        return (v - mu) * jax.lax.rsqrt(var + eps) * w + b

    # ---------------- Phase 1: LN1 + fused QKV projection (one MXU pass) ----------------
    h = layernorm(x_ref[...].astype(jnp.float32),
                  ln1_w_ref[...], ln1_b_ref[...]).astype(jnp.bfloat16)
    qkv_sc[...] = jnp.dot(
        h, qkv_w_ref[...], preferred_element_type=jnp.float32).astype(jnp.bfloat16)

    # ---------------- Phase 2: attention, one (batch, head-group) per iteration ----------
    def attn_body(idx):
        b = idx // n_groups
        g = idx % n_groups
        r0 = _mul_hint(b * N, N)
        c0 = _mul_hint(g * gw, gw)
        outs = []
        for j in range(hpg):
            ch = _mul_hint(c0 + j * head_dim, head_dim)
            qh = qkv_sc[pl.ds(r0, N), pl.ds(ch, head_dim)]            # (N, hd) bf16
            kh = qkv_sc[pl.ds(r0, N), pl.ds(C + ch, head_dim)]
            vh = qkv_sc[pl.ds(r0, N), pl.ds(2 * C + ch, head_dim)]
            # q @ k^T (contract head dim of both sides), f32 accumulation, scale on logits.
            logits = jax.lax.dot_general(
                qh, kh, (((1,), (1,)), ((), ())),
                preferred_element_type=jnp.float32) * scale           # (N, N) f32
            logits = logits - jnp.max(logits, axis=-1, keepdims=True)
            p = jnp.exp(logits)
            p = p * pl.reciprocal(jnp.sum(p, axis=-1, keepdims=True), approx=True)
            o = jnp.dot(p.astype(jnp.bfloat16), vh,
                        preferred_element_type=jnp.float32)           # (N, hd) f32
            outs.append(o.astype(jnp.bfloat16))
        grp = outs[0] if hpg == 1 else jnp.concatenate(outs, axis=-1)  # (N, gw) bf16
        attn_sc[pl.ds(r0, N), pl.ds(c0, gw)] = grp                     # lane-dense store

    total = batch_tile * n_groups
    if total <= 8:
        for idx in range(total):                                       # tiny: static unroll
            attn_body(idx)
    else:
        @pl.loop(0, total)                                             # bounded live ranges
        def _(idx):
            attn_body(idx)

    # ------- Phase 3: proj + residual + LN2 + MLP, fused over row chunks -------
    inv_sqrt2 = np.float32(1.0 / math.sqrt(2.0))

    def mlp_body(ci):
        r0 = _mul_hint(ci * mlp_chunk, mlp_chunk)
        xa = x_ref[pl.ds(r0, mlp_chunk), :].astype(jnp.float32)        # residual stream
        a = attn_sc[pl.ds(r0, mlp_chunk), :]                           # bf16
        res = xa + (jnp.dot(a, proj_w_ref[...],
                            preferred_element_type=jnp.float32) + proj_b_ref[...])
        h2 = layernorm(res, ln2_w_ref[...], ln2_b_ref[...]).astype(jnp.bfloat16)
        h2 = jnp.dot(h2, fc1_w_ref[...],
                     preferred_element_type=jnp.float32) + fc1_b_ref[...]
        # exact erf GELU in f32 (matches torch.nn.GELU()); elementwise stays f32 (v5e-safe).
        h2 = 0.5 * h2 * (1.0 + jax.lax.erf(h2 * inv_sqrt2))
        h2 = jnp.dot(h2.astype(jnp.bfloat16), fc2_w_ref[...],
                     preferred_element_type=jnp.float32) + fc2_b_ref[...]
        out_ref[pl.ds(r0, mlp_chunk), :] = (res + h2).astype(out_ref.dtype)

    n_chunks = rows // mlp_chunk
    if n_chunks <= 2:
        for ci in range(n_chunks):
            mlp_body(ci)
    else:
        @pl.loop(0, n_chunks)
        def _(ci):
            mlp_body(ci)


# ---------------------------------------------------------------------------
# Wrapper: grid over batch tiles; weights bound whole into VMEM (single copy).
# ---------------------------------------------------------------------------
def _pick_batch_tile(B, N, max_rows):
    """Largest divisor of B with bt*N <= max_rows, keeping >= 2 grid steps when possible."""
    best = 1
    for cand in range(1, B + 1):
        if B % cand != 0:
            continue
        if cand * N > max(max_rows, N):
            continue
        if B >= 2 and B // cand < 2:
            continue                      # keep both v7x TensorCores busy
        best = cand
    return best


def block_forward(x, params, *, num_heads, eps=1e-5, batch_tile=None):
    B, N, C = x.shape
    head_dim = C // num_heads
    hidden = params["fc1_w"].shape[1]
    scale = float(head_dim ** -0.5)

    # Group heads so each attention-output store is a multiple of 128 lanes when possible.
    heads_per_group = num_heads
    for g in range(1, num_heads + 1):
        if num_heads % g == 0 and (g * head_dim) % 128 == 0:
            heads_per_group = g
            break

    bf16, f32 = jnp.bfloat16, jnp.float32
    weight_args = (
        params["ln1_w"].astype(f32), params["ln1_b"].astype(f32),
        params["qkv_w"].astype(bf16),
        params["proj_w"].astype(bf16), params["proj_b"].astype(f32),
        params["ln2_w"].astype(f32), params["ln2_b"].astype(f32),
        params["fc1_w"].astype(bf16), params["fc1_b"].astype(f32),
        params["fc2_w"].astype(bf16), params["fc2_b"].astype(f32),
    )

    # Generation-aware VMEM capacity (v7x: 64 MiB/TC, v5e/v6e: 128 MiB).
    try:
        vmem_cap = int(pltpu.get_tpu_info().vmem_capacity_bytes)
    except Exception:                                  # conservative fallback
        vmem_cap = 64 * 1024 * 1024
    max_rows = 256 if vmem_cap <= 64 * 1024 * 1024 else 512

    bt = _pick_batch_tile(B, N, max_rows) if batch_tile is None else batch_tile
    assert B % bt == 0, "batch_tile must divide batch"
    rows = bt * N

    # MLP row chunk: largest divisor of rows <= 256 (falls back to full rows if degenerate).
    mlp_chunk = rows
    for d in range(min(rows, 256), 0, -1):
        if rows % d == 0:
            mlp_chunk = d
            break
    if mlp_chunk < min(rows, 64):
        mlp_chunk = rows

    # VMEM budget: resident weights + scratches + double-buffered I/O + activation slack.
    wbytes = sum(int(np.prod(w.shape)) * w.dtype.itemsize for w in weight_args)
    scratch_bytes = 2 * rows * 3 * C + 2 * rows * C                   # bf16 qkv_sc + attn_sc
    io_bytes = 2 * 2 * rows * C * x.dtype.itemsize                    # double-buffered in+out
    act_bytes = 4 * rows * 4 * C + 4 * mlp_chunk * (2 * hidden + 4 * C) + 4 * N * N
    needed = wbytes + scratch_bytes + io_bytes + 2 * act_bytes
    vmem_limit = int(min(vmem_cap - 8 * 1024 * 1024,
                         max(needed, 16 * 1024 * 1024)))

    kernel = functools.partial(
        _block_kernel, num_heads=num_heads, head_dim=head_dim, seq_len=N,
        batch_tile=bt, heads_per_group=heads_per_group, mlp_chunk=mlp_chunk,
        eps=eps, scale=scale)

    # Weights are identical for every grid step: bind whole arrays into VMEM (no blocking
    # => no double-buffered weight copies).
    weight_spec = pl.BlockSpec(memory_space=pltpu.MemorySpace.VMEM)

    x2 = x.reshape(B * N, C)                       # one-time HBM relayout, no in-kernel reshape
    out2 = pl.pallas_call(
        kernel,
        out_shape=jax.ShapeDtypeStruct((B * N, C), x.dtype),
        grid_spec=pltpu.PrefetchScalarGridSpec(
            num_scalar_prefetch=0,
            grid=(B // bt,),
            in_specs=[pl.BlockSpec((rows, C), lambda g: (g, 0))]
                     + [weight_spec] * len(weight_args),
            out_specs=pl.BlockSpec((rows, C), lambda g: (g, 0)),
            scratch_shapes=[pltpu.VMEM((rows, 3 * C), jnp.bfloat16),
                            pltpu.VMEM((rows, C), jnp.bfloat16)],
        ),
        compiler_params=pltpu.CompilerParams(
            dimension_semantics=("parallel",),
            vmem_limit_bytes=vmem_limit),
    )(x2, *weight_args)
    return out2.reshape(B, N, C)


# ---------------------------------------------------------------------------
# Pure-JAX f32 reference (mirrors the PyTorch forward) for correctness checking.
# ---------------------------------------------------------------------------
def block_reference(x, params, *, num_heads, eps=1e-5):
    B, N, C = x.shape
    hd = C // num_heads
    scale = hd ** (-0.5)

    def ln(v, w, b):
        mu = jnp.mean(v, axis=-1, keepdims=True)
        var = jnp.mean((v - mu) ** 2, axis=-1, keepdims=True)
        return (v - mu) / jnp.sqrt(var + eps) * w + b

    h = ln(x, params["ln1_w"][0], params["ln1_b"][0])
    qkv = h @ params["qkv_w"]                                  # (B, N, 3C)
    qkv = qkv.reshape(B, N, 3, num_heads, hd).transpose(2, 0, 3, 1, 4)
    q, k, v = qkv[0] * scale, qkv[1], qkv[2]                   # (B, H, N, hd)
    attn = jnp.einsum("bhnd,bhmd->bhnm", q, k)
    attn = jax.nn.softmax(attn, axis=-1)
    o = jnp.einsum("bhnm,bhmd->bhnd", attn, v)
    o = o.transpose(0, 2, 1, 3).reshape(B, N, C)
    o = o @ params["proj_w"] + params["proj_b"][0]
    x = x + o

    h2 = ln(x, params["ln2_w"][0], params["ln2_b"][0])
    h2 = h2 @ params["fc1_w"] + params["fc1_b"][0]
    h2 = 0.5 * h2 * (1.0 + jax.lax.erf(h2 / jnp.sqrt(2.0)))
    h2 = h2 @ params["fc2_w"] + params["fc2_b"][0]
    return x + h2


# ---------------------------------------------------------------------------
# Deterministic parameter init + demo run.
# ---------------------------------------------------------------------------
def init_params(key, dim, mlp_ratio=4.0):
    hidden = int(dim * mlp_ratio)
    ks = jax.random.split(key, 8)
    s = 0.02
    return {
        "ln1_w": jnp.ones((1, dim), jnp.float32),
        "ln1_b": jnp.zeros((1, dim), jnp.float32),
        "qkv_w": s * jax.random.normal(ks[0], (dim, 3 * dim), jnp.float32),
        "proj_w": s * jax.random.normal(ks[1], (dim, dim), jnp.float32),
        "proj_b": s * jax.random.normal(ks[2], (1, dim), jnp.float32),
        "ln2_w": jnp.ones((1, dim), jnp.float32),
        "ln2_b": jnp.zeros((1, dim), jnp.float32),
        "fc1_w": s * jax.random.normal(ks[3], (dim, hidden), jnp.float32),
        "fc1_b": s * jax.random.normal(ks[4], (1, hidden), jnp.float32),
        "fc2_w": s * jax.random.normal(ks[5], (hidden, dim), jnp.float32),
        "fc2_b": s * jax.random.normal(ks[6], (1, dim), jnp.float32),
    }


if __name__ == "__main__":
    B, N, C = 4, 8, 32          # batch, tokens (H*W = 4*2), channels
    num_heads = 4
    H, W = 4, 2                 # spatial extents passed to forward (unused by the math)

    key = jax.random.PRNGKey(0)
    kx, kp = jax.random.split(key)
    x = jax.random.normal(kx, (B, N, C), jnp.float32)
    params = init_params(kp, C, mlp_ratio=4.0)

    # batch_tile=2 -> grid of 2 steps, exercising the batch-tiled "parallel" grid axis.
    out = block_forward(x, params, num_heads=num_heads, batch_tile=2)
    out = jax.block_until_ready(out)

    ref = block_reference(x, params, num_heads=num_heads)
    # bf16 matmul operands / weights + approx reciprocal => compare at ~1e-2 tolerance.
    np.testing.assert_allclose(np.asarray(out), np.asarray(ref),
                               rtol=1e-2, atol=1e-2)
    print("KERNEL_OK")
</pallas_src>

<mosaic_0001>
module attributes {stable_mosaic.version = 11 : i64} {
  func.func @_block_kernel(%arg0: i32, %arg1: memref<16x32xf32, #tpu.memory_space<vmem>>, %arg2: memref<1x32xf32, #tpu.memory_space<vmem>>, %arg3: memref<1x32xf32, #tpu.memory_space<vmem>>, %arg4: memref<32x96xbf16, #tpu.memory_space<vmem>>, %arg5: memref<32x32xbf16, #tpu.memory_space<vmem>>, %arg6: memref<1x32xf32, #tpu.memory_space<vmem>>, %arg7: memref<1x32xf32, #tpu.memory_space<vmem>>, %arg8: memref<1x32xf32, #tpu.memory_space<vmem>>, %arg9: memref<32x128xbf16, #tpu.memory_space<vmem>>, %arg10: memref<1x128xf32, #tpu.memory_space<vmem>>, %arg11: memref<128x32xbf16, #tpu.memory_space<vmem>>, %arg12: memref<1x32xf32, #tpu.memory_space<vmem>>, %arg13: memref<16x32xf32, #tpu.memory_space<vmem>>, %arg14: memref<16x96xbf16, #tpu.memory_space<vmem>>, %arg15: memref<16x32xbf16, #tpu.memory_space<vmem>>) attributes {dimension_semantics = [#tpu.dimension_semantics<parallel>], iteration_bounds = array<i64: 2>, scalar_prefetch = 0 : i64, scratch_operands = 2 : i64, tpu.core_type = #tpu.core_type<tc>, window_params = [{transform_indices = @transform_0, window_bounds = array<i64: 16, 32>}, {pipeline_mode = #tpu.pipeline_mode<synchronous>, transform_indices = @transform_1, window_bounds = array<i64: 1, 32>}, {pipeline_mode = #tpu.pipeline_mode<synchronous>, transform_indices = @transform_2, window_bounds = array<i64: 1, 32>}, {pipeline_mode = #tpu.pipeline_mode<synchronous>, transform_indices = @transform_3, window_bounds = array<i64: 32, 96>}, {pipeline_mode = #tpu.pipeline_mode<synchronous>, transform_indices = @transform_4, window_bounds = array<i64: 32, 32>}, {pipeline_mode = #tpu.pipeline_mode<synchronous>, transform_indices = @transform_5, window_bounds = array<i64: 1, 32>}, {pipeline_mode = #tpu.pipeline_mode<synchronous>, transform_indices = @transform_6, window_bounds = array<i64: 1, 32>}, {pipeline_mode = #tpu.pipeline_mode<synchronous>, transform_indices = @transform_7, window_bounds = array<i64: 1, 32>}, {pipeline_mode = #tpu.pipeline_mode<synchronous>, transform_indices = @transform_8, window_bounds = array<i64: 32, 128>}, {pipeline_mode = #tpu.pipeline_mode<synchronous>, transform_indices = @transform_9, window_bounds = array<i64: 1, 128>}, {pipeline_mode = #tpu.pipeline_mode<synchronous>, transform_indices = @transform_10, window_bounds = array<i64: 128, 32>}, {pipeline_mode = #tpu.pipeline_mode<synchronous>, transform_indices = @transform_11, window_bounds = array<i64: 1, 32>}, {transform_indices = @transform_12, window_bounds = array<i64: 16, 32>}]} {
    %c0 = arith.constant 0 : index
    %c0_0 = arith.constant 0 : index
    %0 = vector.load %arg1[%c0, %c0_0] : memref<16x32xf32, #tpu.memory_space<vmem>>, vector<16x32xf32>
    %c0_1 = arith.constant 0 : index
    %c0_2 = arith.constant 0 : index
    %1 = vector.load %arg2[%c0_1, %c0_2] : memref<1x32xf32, #tpu.memory_space<vmem>>, vector<1x32xf32>
    %c0_3 = arith.constant 0 : index
    %c0_4 = arith.constant 0 : index
    %2 = vector.load %arg3[%c0_3, %c0_4] : memref<1x32xf32, #tpu.memory_space<vmem>>, vector<1x32xf32>
    %cst = arith.constant dense<0.000000e+00> : vector<16xf32>
    %3 = vector.multi_reduction <add>, %0, %cst [1] : vector<16x32xf32> to vector<16xf32>
    %4 = vector.shape_cast %3 : vector<16xf32> to vector<16x1xf32>
    %cst_5 = arith.constant 3.200000e+01 : f32
    %5 = vector.broadcast %cst_5 : f32 to vector<16x1xf32>
    %6 = arith.divf %4, %5 : vector<16x1xf32>
    %7 = vector.broadcast %6 : vector<16x1xf32> to vector<16x32xf32>
    %8 = arith.subf %0, %7 : vector<16x32xf32>
    %9 = arith.mulf %8, %8 : vector<16x32xf32>
    %cst_6 = arith.constant dense<0.000000e+00> : vector<16xf32>
    %10 = vector.multi_reduction <add>, %9, %cst_6 [1] : vector<16x32xf32> to vector<16xf32>
    %11 = vector.shape_cast %10 : vector<16xf32> to vector<16x1xf32>
    %cst_7 = arith.constant 3.200000e+01 : f32
    %12 = vector.broadcast %cst_7 : f32 to vector<16x1xf32>
    %13 = arith.divf %11, %12 : vector<16x1xf32>
    %14 = vector.broadcast %6 : vector<16x1xf32> to vector<16x32xf32>
    %15 = arith.subf %0, %14 : vector<16x32xf32>
    %cst_8 = arith.constant 9.99999974E-6 : f32
    %16 = vector.broadcast %cst_8 : f32 to vector<16x1xf32>
    %17 = arith.addf %13, %16 : vector<16x1xf32>
    %18 = math.rsqrt %17 : vector<16x1xf32>
    %19 = vector.broadcast %18 : vector<16x1xf32> to vector<16x32xf32>
    %20 = arith.mulf %15, %19 : vector<16x32xf32>
    %21 = vector.broadcast %1 : vector<1x32xf32> to vector<16x32xf32>
    %22 = arith.mulf %20, %21 : vector<16x32xf32>
    %23 = vector.broadcast %2 : vector<1x32xf32> to vector<16x32xf32>
    %24 = arith.addf %22, %23 : vector<16x32xf32>
    %25 = arith.truncf %24 : vector<16x32xf32> to vector<16x32xbf16>
    %c0_9 = arith.constant 0 : index
    %c0_10 = arith.constant 0 : index
    %26 = vector.load %arg4[%c0_9, %c0_10] : memref<32x96xbf16, #tpu.memory_space<vmem>>, vector<32x96xbf16>
    %cst_11 = arith.constant dense<0.000000e+00> : vector<16x96xf32>
    %27 = tpu.matmul %25, %26, %cst_11 {dimension_numbers = #tpu.dot_dimension_numbers<[1], [0], [0], [1], [0, 0, 1, 1], [], []>} : vector<16x32xbf16>, vector<32x96xbf16>, vector<16x96xf32> -> vector<16x96xf32>
    %28 = arith.truncf %27 : vector<16x96xf32> to vector<16x96xbf16>
    %c0_12 = arith.constant 0 : index
    %c0_13 = arith.constant 0 : index
    %29 = vector.load %arg14[%c0_12, %c0_13] : memref<16x96xbf16, #tpu.memory_space<vmem>>, vector<16x96xbf16>
    tpu.vector_store %arg14[%c0_12, %c0_13], %28 {strides = array<i32>} : memref<16x96xbf16, #tpu.memory_space<vmem>>, vector<16x96xbf16>,
    %c0_14 = arith.constant 0 : index
    %c0_15 = arith.constant 0 : index
    %30 = vector.load %arg14[%c0_14, %c0_15] : memref<16x96xbf16, #tpu.memory_space<vmem>>, vector<8x8xbf16>
    %c0_16 = arith.constant 0 : index
    %c32 = arith.constant 32 : index
    %31 = vector.load %arg14[%c0_16, %c32] : memref<16x96xbf16, #tpu.memory_space<vmem>>, vector<8x8xbf16>
    %c0_17 = arith.constant 0 : index
    %c64 = arith.constant 64 : index
    %32 = vector.load %arg14[%c0_17, %c64] : memref<16x96xbf16, #tpu.memory_space<vmem>>, vector<8x8xbf16>
    %cst_18 = arith.constant dense<0.000000e+00> : vector<8x8xf32>
    %33 = tpu.matmul %30, %31, %cst_18 {dimension_numbers = #tpu.dot_dimension_numbers<[1], [1], [0], [0], [0, 0, 1, 0], [], []>} : vector<8x8xbf16>, vector<8x8xbf16>, vector<8x8xf32> -> vector<8x8xf32>
    %cst_19 = arith.constant 0.353553385 : f32
    %34 = vector.broadcast %cst_19 : f32 to vector<8x8xf32>
    %35 = arith.mulf %33, %34 : vector<8x8xf32>
    %cst_20 = arith.constant dense<0xFF800000> : vector<8xf32>
    %36 = vector.multi_reduction <maximumf>, %35, %cst_20 [1] : vector<8x8xf32> to vector<8xf32>
    %37 = vector.shape_cast %36 : vector<8xf32> to vector<8x1xf32>
    %38 = vector.broadcast %37 : vector<8x1xf32> to vector<8x8xf32>
    %39 = arith.subf %35, %38 : vector<8x8xf32>
    %40 = math.exp %39 : vector<8x8xf32>
    %cst_21 = arith.constant dense<0.000000e+00> : vector<8xf32>
    %41 = vector.multi_reduction <add>, %40, %cst_21 [1] : vector<8x8xf32> to vector<8xf32>
    %42 = vector.shape_cast %41 : vector<8xf32> to vector<8x1xf32>
    %43 = tpu.reciprocal %42 {approx = true} : vector<8x1xf32> -> vector<8x1xf32>
    %44 = vector.broadcast %43 : vector<8x1xf32> to vector<8x8xf32>
    %45 = arith.mulf %40, %44 : vector<8x8xf32>
    %46 = arith.truncf %45 : vector<8x8xf32> to vector<8x8xbf16>
    %cst_22 = arith.constant dense<0.000000e+00> : vector<8x8xf32>
    %47 = tpu.matmul %46, %32, %cst_22 {dimension_numbers = #tpu.dot_dimension_numbers<[1], [0], [0], [1], [0, 0, 1, 1], [], []>} : vector<8x8xbf16>, vector<8x8xbf16>, vector<8x8xf32> -> vector<8x8xf32>
    %48 = arith.truncf %47 : vector<8x8xf32> to vector<8x8xbf16>
    %c0_23 = arith.constant 0 : index
    %c8 = arith.constant 8 : index
    %49 = vector.load %arg14[%c0_23, %c8] : memref<16x96xbf16, #tpu.memory_space<vmem>>, vector<8x8xbf16>
    %c0_24 = arith.constant 0 : index
    %c40 = arith.constant 40 : index
    %50 = vector.load %arg14[%c0_24, %c40] : memref<16x96xbf16, #tpu.memory_space<vmem>>, vector<8x8xbf16>
    %c0_25 = arith.constant 0 : index
    %c72 = arith.constant 72 : index
    %51 = vector.load %arg14[%c0_25, %c72] : memref<16x96xbf16, #tpu.memory_space<vmem>>, vector<8x8xbf16>
    %cst_26 = arith.constant dense<0.000000e+00> : vector<8x8xf32>
    %52 = tpu.matmul %49, %50, %cst_26 {dimension_numbers = #tpu.dot_dimension_numbers<[1], [1], [0], [0], [0, 0, 1, 0], [], []>} : vector<8x8xbf16>, vector<8x8xbf16>, vector<8x8xf32> -> vector<8x8xf32>
    %cst_27 = arith.constant 0.353553385 : f32
    %53 = vector.broadcast %cst_27 : f32 to vector<8x8xf32>
    %54 = arith.mulf %52, %53 : vector<8x8xf32>
    %cst_28 = arith.constant dense<0xFF800000> : vector<8xf32>
    %55 = vector.multi_reduction <maximumf>, %54, %cst_28 [1] : vector<8x8xf32> to vector<8xf32>
    %56 = vector.shape_cast %55 : vector<8xf32> to vector<8x1xf32>
    %57 = vector.broadcast %56 : vector<8x1xf32> to vector<8x8xf32>
    %58 = arith.subf %54, %57 : vector<8x8xf32>
    %59 = math.exp %58 : vector<8x8xf32>
    %cst_29 = arith.constant dense<0.000000e+00> : vector<8xf32>
    %60 = vector.multi_reduction <add>, %59, %cst_29 [1] : vector<8x8xf32> to vector<8xf32>
    %61 = vector.shape_cast %60 : vector<8xf32> to vector<8x1xf32>
    %62 = tpu.reciprocal %61 {approx = true} : vector<8x1xf32> -> vector<8x1xf32>
    %63 = vector.broadcast %62 : vector<8x1xf32> to vector<8x8xf32>
    %64 = arith.mulf %59, %63 : vector<8x8xf32>
    %65 = arith.truncf %64 : vector<8x8xf32> to vector<8x8xbf16>
    %cst_30 = arith.constant dense<0.000000e+00> : vector<8x8xf32>
    %66 = tpu.matmul %65, %51, %cst_30 {dimension_numbers = #tpu.dot_dimension_numbers<[1], [0], [0], [1], [0, 0, 1, 1], [], []>} : vector<8x8xbf16>, vector<8x8xbf16>, vector<8x8xf32> -> vector<8x8xf32>
    %67 = arith.truncf %66 : vector<8x8xf32> to vector<8x8xbf16>
    %c0_31 = arith.constant 0 : index
    %c16 = arith.constant 16 : index
    %68 = vector.load %arg14[%c0_31, %c16] : memref<16x96xbf16, #tpu.memory_space<vmem>>, vector<8x8xbf16>
    %c0_32 = arith.constant 0 : index
    %c48 = arith.constant 48 : index
    %69 = vector.load %arg14[%c0_32, %c48] : memref<16x96xbf16, #tpu.memory_space<vmem>>, vector<8x8xbf16>
    %c0_33 = arith.constant 0 : index
    %c80 = arith.constant 80 : index
    %70 = vector.load %arg14[%c0_33, %c80] : memref<16x96xbf16, #tpu.memory_space<vmem>>, vector<8x8xbf16>
    %cst_34 = arith.constant dense<0.000000e+00> : vector<8x8xf32>
    %71 = tpu.matmul %68, %69, %cst_34 {dimension_numbers = #tpu.dot_dimension_numbers<[1], [1], [0], [0], [0, 0, 1, 0], [], []>} : vector<8x8xbf16>, vector<8x8xbf16>, vector<8x8xf32> -> vector<8x8xf32>
    %cst_35 = arith.constant 0.353553385 : f32
    %72 = vector.broadcast %cst_35 : f32 to vector<8x8xf32>
    %73 = arith.mulf %71, %72 : vector<8x8xf32>
    %cst_36 = arith.constant dense<0xFF800000> : vector<8xf32>
    %74 = vector.multi_reduction <maximumf>, %73, %cst_36 [1] : vector<8x8xf32> to vector<8xf32>
    %75 = vector.shape_cast %74 : vector<8xf32> to vector<8x1xf32>
    %76 = vector.broadcast %75 : vector<8x1xf32> to vector<8x8xf32>
    %77 = arith.subf %73, %76 : vector<8x8xf32>
    %78 = math.exp %77 : vector<8x8xf32>
    %cst_37 = arith.constant dense<0.000000e+00> : vector<8xf32>
    %79 = vector.multi_reduction <add>, %78, %cst_37 [1] : vector<8x8xf32> to vector<8xf32>
    %80 = vector.shape_cast %79 : vector<8xf32> to vector<8x1xf32>
    %81 = tpu.reciprocal %80 {approx = true} : vector<8x1xf32> -> vector<8x1xf32>
    %82 = vector.broadcast %81 : vector<8x1xf32> to vector<8x8xf32>
    %83 = arith.mulf %78, %82 : vector<8x8xf32>
    %84 = arith.truncf %83 : vector<8x8xf32> to vector<8x8xbf16>
    %cst_38 = arith.constant dense<0.000000e+00> : vector<8x8xf32>
    %85 = tpu.matmul %84, %70, %cst_38 {dimension_numbers = #tpu.dot_dimension_numbers<[1], [0], [0], [1], [0, 0, 1, 1], [], []>} : vector<8x8xbf16>, vector<8x8xbf16>, vector<8x8xf32> -> vector<8x8xf32>
    %86 = arith.truncf %85 : vector<8x8xf32> to vector<8x8xbf16>
    %c0_39 = arith.constant 0 : index
    %c24 = arith.constant 24 : index
    %87 = vector.load %arg14[%c0_39, %c24] : memref<16x96xbf16, #tpu.memory_space<vmem>>, vector<8x8xbf16>
    %c0_40 = arith.constant 0 : index
    %c56 = arith.constant 56 : index
    %88 = vector.load %arg14[%c0_40, %c56] : memref<16x96xbf16, #tpu.memory_space<vmem>>, vector<8x8xbf16>
    %c0_41 = arith.constant 0 : index
    %c88 = arith.constant 88 : index
    %89 = vector.load %arg14[%c0_41, %c88] : memref<16x96xbf16, #tpu.memory_space<vmem>>, vector<8x8xbf16>
    %cst_42 = arith.constant dense<0.000000e+00> : vector<8x8xf32>
    %90 = tpu.matmul %87, %88, %cst_42 {dimension_numbers = #tpu.dot_dimension_numbers<[1], [1], [0], [0], [0, 0, 1, 0], [], []>} : vector<8x8xbf16>, vector<8x8xbf16>, vector<8x8xf32> -> vector<8x8xf32>
    %cst_43 = arith.constant 0.353553385 : f32
    %91 = vector.broadcast %cst_43 : f32 to vector<8x8xf32>
    %92 = arith.mulf %90, %91 : vector<8x8xf32>
    %cst_44 = arith.constant dense<0xFF800000> : vector<8xf32>
    %93 = vector.multi_reduction <maximumf>, %92, %cst_44 [1] : vector<8x8xf32> to vector<8xf32>
    %94 = vector.shape_cast %93 : vector<8xf32> to vector<8x1xf32>
    %95 = vector.broadcast %94 : vector<8x1xf32> to vector<8x8xf32>
    %96 = arith.subf %92, %95 : vector<8x8xf32>
    %97 = math.exp %96 : vector<8x8xf32>
    %cst_45 = arith.constant dense<0.000000e+00> : vector<8xf32>
    %98 = vector.multi_reduction <add>, %97, %cst_45 [1] : vector<8x8xf32> to vector<8xf32>
    %99 = vector.shape_cast %98 : vector<8xf32> to vector<8x1xf32>
    %100 = tpu.reciprocal %99 {approx = true} : vector<8x1xf32> -> vector<8x1xf32>
    %101 = vector.broadcast %100 : vector<8x1xf32> to vector<8x8xf32>
    %102 = arith.mulf %97, %101 : vector<8x8xf32>
    %103 = arith.truncf %102 : vector<8x8xf32> to vector<8x8xbf16>
    %cst_46 = arith.constant dense<0.000000e+00> : vector<8x8xf32>
    %104 = tpu.matmul %103, %89, %cst_46 {dimension_numbers = #tpu.dot_dimension_numbers<[1], [0], [0], [1], [0, 0, 1, 1], [], []>} : vector<8x8xbf16>, vector<8x8xbf16>, vector<8x8xf32> -> vector<8x8xf32>
    %105 = arith.truncf %104 : vector<8x8xf32> to vector<8x8xbf16>
    %106 = tpu.concatenate %48, %67, %86, %105 in 1 : vector<8x8xbf16>, vector<8x8xbf16>, vector<8x8xbf16>, vector<8x8xbf16> -> vector<8x32xbf16>
    %c0_47 = arith.constant 0 : index
    %c0_48 = arith.constant 0 : index
    %107 = vector.load %arg15[%c0_47, %c0_48] : memref<16x32xbf16, #tpu.memory_space<vmem>>, vector<8x32xbf16>
    tpu.vector_store %arg15[%c0_47, %c0_48], %106 {strides = array<i32>} : memref<16x32xbf16, #tpu.memory_space<vmem>>, vector<8x32xbf16>,
    %c8_49 = arith.constant 8 : index
    %c0_50 = arith.constant 0 : index
    %108 = vector.load %arg14[%c8_49, %c0_50] : memref<16x96xbf16, #tpu.memory_space<vmem>>, vector<8x8xbf16>
    %c8_51 = arith.constant 8 : index
    %c32_52 = arith.constant 32 : index
    %109 = vector.load %arg14[%c8_51, %c32_52] : memref<16x96xbf16, #tpu.memory_space<vmem>>, vector<8x8xbf16>
    %c8_53 = arith.constant 8 : index
    %c64_54 = arith.constant 64 : index
    %110 = vector.load %arg14[%c8_53, %c64_54] : memref<16x96xbf16, #tpu.memory_space<vmem>>, vector<8x8xbf16>
    %cst_55 = arith.constant dense<0.000000e+00> : vector<8x8xf32>
    %111 = tpu.matmul %108, %109, %cst_55 {dimension_numbers = #tpu.dot_dimension_numbers<[1], [1], [0], [0], [0, 0, 1, 0], [], []>} : vector<8x8xbf16>, vector<8x8xbf16>, vector<8x8xf32> -> vector<8x8xf32>
    %cst_56 = arith.constant 0.353553385 : f32
    %112 = vector.broadcast %cst_56 : f32 to vector<8x8xf32>
    %113 = arith.mulf %111, %112 : vector<8x8xf32>
    %cst_57 = arith.constant dense<0xFF800000> : vector<8xf32>
    %114 = vector.multi_reduction <maximumf>, %113, %cst_57 [1] : vector<8x8xf32> to vector<8xf32>
    %115 = vector.shape_cast %114 : vector<8xf32> to vector<8x1xf32>
    %116 = vector.broadcast %115 : vector<8x1xf32> to vector<8x8xf32>
    %117 = arith.subf %113, %116 : vector<8x8xf32>
    %118 = math.exp %117 : vector<8x8xf32>
    %cst_58 = arith.constant dense<0.000000e+00> : vector<8xf32>
    %119 = vector.multi_reduction <add>, %118, %cst_58 [1] : vector<8x8xf32> to vector<8xf32>
    %120 = vector.shape_cast %119 : vector<8xf32> to vector<8x1xf32>
    %121 = tpu.reciprocal %120 {approx = true} : vector<8x1xf32> -> vector<8x1xf32>
    %122 = vector.broadcast %121 : vector<8x1xf32> to vector<8x8xf32>
    %123 = arith.mulf %118, %122 : vector<8x8xf32>
    %124 = arith.truncf %123 : vector<8x8xf32> to vector<8x8xbf16>
    %cst_59 = arith.constant dense<0.000000e+00> : vector<8x8xf32>
    %125 = tpu.matmul %124, %110, %cst_59 {dimension_numbers = #tpu.dot_dimension_numbers<[1], [0], [0], [1], [0, 0, 1, 1], [], []>} : vector<8x8xbf16>, vector<8x8xbf16>, vector<8x8xf32> -> vector<8x8xf32>
    %126 = arith.truncf %125 : vector<8x8xf32> to vector<8x8xbf16>
    %c8_60 = arith.constant 8 : index
    %c8_61 = arith.constant 8 : index
    %127 = vector.load %arg14[%c8_60, %c8_61] : memref<16x96xbf16, #tpu.memory_space<vmem>>, vector<8x8xbf16>
    %c8_62 = arith.constant 8 : index
    %c40_63 = arith.constant 40 : index
    %128 = vector.load %arg14[%c8_62, %c40_63] : memref<16x96xbf16, #tpu.memory_space<vmem>>, vector<8x8xbf16>
    %c8_64 = arith.constant 8 : index
    %c72_65 = arith.constant 72 : index
    %129 = vector.load %arg14[%c8_64, %c72_65] : memref<16x96xbf16, #tpu.memory_space<vmem>>, vector<8x8xbf16>
    %cst_66 = arith.constant dense<0.000000e+00> : vector<8x8xf32>
    %130 = tpu.matmul %127, %128, %cst_66 {dimension_numbers = #tpu.dot_dimension_numbers<[1], [1], [0], [0], [0, 0, 1, 0], [], []>} : vector<8x8xbf16>, vector<8x8xbf16>, vector<8x8xf32> -> vector<8x8xf32>
    %cst_67 = arith.constant 0.353553385 : f32
    %131 = vector.broadcast %cst_67 : f32 to vector<8x8xf32>
    %132 = arith.mulf %130, %131 : vector<8x8xf32>
    %cst_68 = arith.constant dense<0xFF800000> : vector<8xf32>
    %133 = vector.multi_reduction <maximumf>, %132, %cst_68 [1] : vector<8x8xf32> to vector<8xf32>
    %134 = vector.shape_cast %133 : vector<8xf32> to vector<8x1xf32>
    %135 = vector.broadcast %134 : vector<8x1xf32> to vector<8x8xf32>
    %136 = arith.subf %132, %135 : vector<8x8xf32>
    %137 = math.exp %136 : vector<8x8xf32>
    %cst_69 = arith.constant dense<0.000000e+00> : vector<8xf32>
    %138 = vector.multi_reduction <add>, %137, %cst_69 [1] : vector<8x8xf32> to vector<8xf32>
    %139 = vector.shape_cast %138 : vector<8xf32> to vector<8x1xf32>
    %140 = tpu.reciprocal %139 {approx = true} : vector<8x1xf32> -> vector<8x1xf32>
    %141 = vector.broadcast %140 : vector<8x1xf32> to vector<8x8xf32>
    %142 = arith.mulf %137, %141 : vector<8x8xf32>
    %143 = arith.truncf %142 : vector<8x8xf32> to vector<8x8xbf16>
    %cst_70 = arith.constant dense<0.000000e+00> : vector<8x8xf32>
    %144 = tpu.matmul %143, %129, %cst_70 {dimension_numbers = #tpu.dot_dimension_numbers<[1], [0], [0], [1], [0, 0, 1, 1], [], []>} : vector<8x8xbf16>, vector<8x8xbf16>, vector<8x8xf32> -> vector<8x8xf32>
    %145 = arith.truncf %144 : vector<8x8xf32> to vector<8x8xbf16>
    %c8_71 = arith.constant 8 : index
    %c16_72 = arith.constant 16 : index
    %146 = vector.load %arg14[%c8_71, %c16_72] : memref<16x96xbf16, #tpu.memory_space<vmem>>, vector<8x8xbf16>
    %c8_73 = arith.constant 8 : index
    %c48_74 = arith.constant 48 : index
    %147 = vector.load %arg14[%c8_73, %c48_74] : memref<16x96xbf16, #tpu.memory_space<vmem>>, vector<8x8xbf16>
    %c8_75 = arith.constant 8 : index
    %c80_76 = arith.constant 80 : index
    %148 = vector.load %arg14[%c8_75, %c80_76] : memref<16x96xbf16, #tpu.memory_space<vmem>>, vector<8x8xbf16>
    %cst_77 = arith.constant dense<0.000000e+00> : vector<8x8xf32>
    %149 = tpu.matmul %146, %147, %cst_77 {dimension_numbers = #tpu.dot_dimension_numbers<[1], [1], [0], [0], [0, 0, 1, 0], [], []>} : vector<8x8xbf16>, vector<8x8xbf16>, vector<8x8xf32> -> vector<8x8xf32>
    %cst_78 = arith.constant 0.353553385 : f32
    %150 = vector.broadcast %cst_78 : f32 to vector<8x8xf32>
    %151 = arith.mulf %149, %150 : vector<8x8xf32>
    %cst_79 = arith.constant dense<0xFF800000> : vector<8xf32>
    %152 = vector.multi_reduction <maximumf>, %151, %cst_79 [1] : vector<8x8xf32> to vector<8xf32>
    %153 = vector.shape_cast %152 : vector<8xf32> to vector<8x1xf32>
    %154 = vector.broadcast %153 : vector<8x1xf32> to vector<8x8xf32>
    %155 = arith.subf %151, %154 : vector<8x8xf32>
    %156 = math.exp %155 : vector<8x8xf32>
    %cst_80 = arith.constant dense<0.000000e+00> : vector<8xf32>
    %157 = vector.multi_reduction <add>, %156, %cst_80 [1] : vector<8x8xf32> to vector<8xf32>
    %158 = vector.shape_cast %157 : vector<8xf32> to vector<8x1xf32>
    %159 = tpu.reciprocal %158 {approx = true} : vector<8x1xf32> -> vector<8x1xf32>
    %160 = vector.broadcast %159 : vector<8x1xf32> to vector<8x8xf32>
    %161 = arith.mulf %156, %160 : vector<8x8xf32>
    %162 = arith.truncf %161 : vector<8x8xf32> to vector<8x8xbf16>
    %cst_81 = arith.constant dense<0.000000e+00> : vector<8x8xf32>
    %163 = tpu.matmul %162, %148, %cst_81 {dimension_numbers = #tpu.dot_dimension_numbers<[1], [0], [0], [1], [0, 0, 1, 1], [], []>} : vector<8x8xbf16>, vector<8x8xbf16>, vector<8x8xf32> -> vector<8x8xf32>
    %164 = arith.truncf %163 : vector<8x8xf32> to vector<8x8xbf16>
    %c8_82 = arith.constant 8 : index
    %c24_83 = arith.constant 24 : index
    %165 = vector.load %arg14[%c8_82, %c24_83] : memref<16x96xbf16, #tpu.memory_space<vmem>>, vector<8x8xbf16>
    %c8_84 = arith.constant 8 : index
    %c56_85 = arith.constant 56 : index
    %166 = vector.load %arg14[%c8_84, %c56_85] : memref<16x96xbf16, #tpu.memory_space<vmem>>, vector<8x8xbf16>
    %c8_86 = arith.constant 8 : index
    %c88_87 = arith.constant 88 : index
    %167 = vector.load %arg14[%c8_86, %c88_87] : memref<16x96xbf16, #tpu.memory_space<vmem>>, vector<8x8xbf16>
    %cst_88 = arith.constant dense<0.000000e+00> : vector<8x8xf32>
    %168 = tpu.matmul %165, %166, %cst_88 {dimension_numbers = #tpu.dot_dimension_numbers<[1], [1], [0], [0], [0, 0, 1, 0], [], []>} : vector<8x8xbf16>, vector<8x8xbf16>, vector<8x8xf32> -> vector<8x8xf32>
    %cst_89 = arith.constant 0.353553385 : f32
    %169 = vector.broadcast %cst_89 : f32 to vector<8x8xf32>
    %170 = arith.mulf %168, %169 : vector<8x8xf32>
    %cst_90 = arith.constant dense<0xFF800000> : vector<8xf32>
    %171 = vector.multi_reduction <maximumf>, %170, %cst_90 [1] : vector<8x8xf32> to vector<8xf32>
    %172 = vector.shape_cast %171 : vector<8xf32> to vector<8x1xf32>
    %173 = vector.broadcast %172 : vector<8x1xf32> to vector<8x8xf32>
    %174 = arith.subf %170, %173 : vector<8x8xf32>
    %175 = math.exp %174 : vector<8x8xf32>
    %cst_91 = arith.constant dense<0.000000e+00> : vector<8xf32>
    %176 = vector.multi_reduction <add>, %175, %cst_91 [1] : vector<8x8xf32> to vector<8xf32>
    %177 = vector.shape_cast %176 : vector<8xf32> to vector<8x1xf32>
    %178 = tpu.reciprocal %177 {approx = true} : vector<8x1xf32> -> vector<8x1xf32>
    %179 = vector.broadcast %178 : vector<8x1xf32> to vector<8x8xf32>
    %180 = arith.mulf %175, %179 : vector<8x8xf32>
    %181 = arith.truncf %180 : vector<8x8xf32> to vector<8x8xbf16>
    %cst_92 = arith.constant dense<0.000000e+00> : vector<8x8xf32>
    %182 = tpu.matmul %181, %167, %cst_92 {dimension_numbers = #tpu.dot_dimension_numbers<[1], [0], [0], [1], [0, 0, 1, 1], [], []>} : vector<8x8xbf16>, vector<8x8xbf16>, vector<8x8xf32> -> vector<8x8xf32>
    %183 = arith.truncf %182 : vector<8x8xf32> to vector<8x8xbf16>
    %184 = tpu.concatenate %126, %145, %164, %183 in 1 : vector<8x8xbf16>, vector<8x8xbf16>, vector<8x8xbf16>, vector<8x8xbf16> -> vector<8x32xbf16>
    %c8_93 = arith.constant 8 : index
    %c0_94 = arith.constant 0 : index
    %185 = vector.load %arg15[%c8_93, %c0_94] : memref<16x32xbf16, #tpu.memory_space<vmem>>, vector<8x32xbf16>
    tpu.vector_store %arg15[%c8_93, %c0_94], %184 {strides = array<i32>} : memref<16x32xbf16, #tpu.memory_space<vmem>>, vector<8x32xbf16>,
    %c0_95 = arith.constant 0 : index
    %c0_96 = arith.constant 0 : index
    %186 = vector.load %arg1[%c0_95, %c0_96] : memref<16x32xf32, #tpu.memory_space<vmem>>, vector<16x32xf32>
    %c0_97 = arith.constant 0 : index
    %c0_98 = arith.constant 0 : index
    %187 = vector.load %arg15[%c0_97, %c0_98] : memref<16x32xbf16, #tpu.memory_space<vmem>>, vector<16x32xbf16>
    %c0_99 = arith.constant 0 : index
    %c0_100 = arith.constant 0 : index
    %188 = vector.load %arg5[%c0_99, %c0_100] : memref<32x32xbf16, #tpu.memory_space<vmem>>, vector<32x32xbf16>
    %cst_101 = arith.constant dense<0.000000e+00> : vector<16x32xf32>
    %189 = tpu.matmul %187, %188, %cst_101 {dimension_numbers = #tpu.dot_dimension_numbers<[1], [0], [0], [1], [0, 0, 1, 1], [], []>} : vector<16x32xbf16>, vector<32x32xbf16>, vector<16x32xf32> -> vector<16x32xf32>
    %c0_102 = arith.constant 0 : index
    %c0_103 = arith.constant 0 : index
    %190 = vector.load %arg6[%c0_102, %c0_103] : memref<1x32xf32, #tpu.memory_space<vmem>>, vector<1x32xf32>
    %191 = vector.broadcast %190 : vector<1x32xf32> to vector<16x32xf32>
    %192 = arith.addf %189, %191 : vector<16x32xf32>
    %193 = arith.addf %186, %192 : vector<16x32xf32>
    %c0_104 = arith.constant 0 : index
    %c0_105 = arith.constant 0 : index
    %194 = vector.load %arg7[%c0_104, %c0_105] : memref<1x32xf32, #tpu.memory_space<vmem>>, vector<1x32xf32>
    %c0_106 = arith.constant 0 : index
    %c0_107 = arith.constant 0 : index
    %195 = vector.load %arg8[%c0_106, %c0_107] : memref<1x32xf32, #tpu.memory_space<vmem>>, vector<1x32xf32>
    %cst_108 = arith.constant dense<0.000000e+00> : vector<16xf32>
    %196 = vector.multi_reduction <add>, %193, %cst_108 [1] : vector<16x32xf32> to vector<16xf32>
    %197 = vector.shape_cast %196 : vector<16xf32> to vector<16x1xf32>
    %cst_109 = arith.constant 3.200000e+01 : f32
    %198 = vector.broadcast %cst_109 : f32 to vector<16x1xf32>
    %199 = arith.divf %197, %198 : vector<16x1xf32>
    %200 = vector.broadcast %199 : vector<16x1xf32> to vector<16x32xf32>
    %201 = arith.subf %193, %200 : vector<16x32xf32>
    %202 = arith.mulf %201, %201 : vector<16x32xf32>
    %cst_110 = arith.constant dense<0.000000e+00> : vector<16xf32>
    %203 = vector.multi_reduction <add>, %202, %cst_110 [1] : vector<16x32xf32> to vector<16xf32>
    %204 = vector.shape_cast %203 : vector<16xf32> to vector<16x1xf32>
    %cst_111 = arith.constant 3.200000e+01 : f32
    %205 = vector.broadcast %cst_111 : f32 to vector<16x1xf32>
    %206 = arith.divf %204, %205 : vector<16x1xf32>
    %207 = vector.broadcast %199 : vector<16x1xf32> to vector<16x32xf32>
    %208 = arith.subf %193, %207 : vector<16x32xf32>
    %cst_112 = arith.constant 9.99999974E-6 : f32
    %209 = vector.broadcast %cst_112 : f32 to vector<16x1xf32>
    %210 = arith.addf %206, %209 : vector<16x1xf32>
    %211 = math.rsqrt %210 : vector<16x1xf32>
    %212 = vector.broadcast %211 : vector<16x1xf32> to vector<16x32xf32>
    %213 = arith.mulf %208, %212 : vector<16x32xf32>
    %214 = vector.broadcast %194 : vector<1x32xf32> to vector<16x32xf32>
    %215 = arith.mulf %213, %214 : vector<16x32xf32>
    %216 = vector.broadcast %195 : vector<1x32xf32> to vector<16x32xf32>
    %217 = arith.addf %215, %216 : vector<16x32xf32>
    %218 = arith.truncf %217 : vector<16x32xf32> to vector<16x32xbf16>
    %c0_113 = arith.constant 0 : index
    %c0_114 = arith.constant 0 : index
    %219 = vector.load %arg9[%c0_113, %c0_114] : memref<32x128xbf16, #tpu.memory_space<vmem>>, vector<32x128xbf16>
    %cst_115 = arith.constant dense<0.000000e+00> : vector<16x128xf32>
    %220 = tpu.matmul %218, %219, %cst_115 {dimension_numbers = #tpu.dot_dimension_numbers<[1], [0], [0], [1], [0, 0, 1, 1], [], []>} : vector<16x32xbf16>, vector<32x128xbf16>, vector<16x128xf32> -> vector<16x128xf32>
    %c0_116 = arith.constant 0 : index
    %c0_117 = arith.constant 0 : index
    %221 = vector.load %arg10[%c0_116, %c0_117] : memref<1x128xf32, #tpu.memory_space<vmem>>, vector<1x128xf32>
    %222 = vector.broadcast %221 : vector<1x128xf32> to vector<16x128xf32>
    %223 = arith.addf %220, %222 : vector<16x128xf32>
    %cst_118 = arith.constant 5.000000e-01 : f32
    %224 = vector.broadcast %cst_118 : f32 to vector<16x128xf32>
    %225 = arith.mulf %224, %223 : vector<16x128xf32>
    %cst_119 = arith.constant 0.707106769 : f32
    %226 = vector.broadcast %cst_119 : f32 to vector<16x128xf32>
    %227 = arith.mulf %223, %226 : vector<16x128xf32>
    %228 = math.erf %227 : vector<16x128xf32>
    %cst_120 = arith.constant 1.000000e+00 : f32
    %229 = vector.broadcast %cst_120 : f32 to vector<16x128xf32>
    %230 = arith.addf %229, %228 : vector<16x128xf32>
    %231 = arith.mulf %225, %230 : vector<16x128xf32>
    %232 = arith.truncf %231 : vector<16x128xf32> to vector<16x128xbf16>
    %c0_121 = arith.constant 0 : index
    %c0_122 = arith.constant 0 : index
    %233 = vector.load %arg11[%c0_121, %c0_122] : memref<128x32xbf16, #tpu.memory_space<vmem>>, vector<128x32xbf16>
    %cst_123 = arith.constant dense<0.000000e+00> : vector<16x32xf32>
    %234 = tpu.matmul %232, %233, %cst_123 {dimension_numbers = #tpu.dot_dimension_numbers<[1], [0], [0], [1], [0, 0, 1, 1], [], []>} : vector<16x128xbf16>, vector<128x32xbf16>, vector<16x32xf32> -> vector<16x32xf32>
    %c0_124 = arith.constant 0 : index
    %c0_125 = arith.constant 0 : index
    %235 = vector.load %arg12[%c0_124, %c0_125] : memref<1x32xf32, #tpu.memory_space<vmem>>, vector<1x32xf32>
    %236 = vector.broadcast %235 : vector<1x32xf32> to vector<16x32xf32>
    %237 = arith.addf %234, %236 : vector<16x32xf32>
    %238 = arith.addf %193, %237 : vector<16x32xf32>
    %c0_126 = arith.constant 0 : index
    %c0_127 = arith.constant 0 : index
    %239 = vector.load %arg13[%c0_126, %c0_127] : memref<16x32xf32, #tpu.memory_space<vmem>>, vector<16x32xf32>
    tpu.vector_store %arg13[%c0_126, %c0_127], %238 {strides = array<i32>} : memref<16x32xf32, #tpu.memory_space<vmem>>, vector<16x32xf32>,
    return
  }
  func.func @transform_0(%arg0: i32) -> (i32, i32) {
    %c0_i32 = arith.constant 0 : i32
    %c0_i32_0 = arith.constant 0 : i32
    return %arg0, %c0_i32 : i32, i32
  }
  func.func @transform_1(%arg0: i32) -> (i32, i32) {
    %c0_i32 = arith.constant 0 : i32
    %c0_i32_0 = arith.constant 0 : i32
    %c0_i32_1 = arith.constant 0 : i32
    return %c0_i32, %c0_i32_0 : i32, i32
  }
  func.func @transform_2(%arg0: i32) -> (i32, i32) {
    %c0_i32 = arith.constant 0 : i32
    %c0_i32_0 = arith.constant 0 : i32
    %c0_i32_1 = arith.constant 0 : i32
    return %c0_i32, %c0_i32_0 : i32, i32
  }
  func.func @transform_3(%arg0: i32) -> (i32, i32) {
    %c0_i32 = arith.constant 0 : i32
    %c0_i32_0 = arith.constant 0 : i32
    %c0_i32_1 = arith.constant 0 : i32
    return %c0_i32, %c0_i32_0 : i32, i32
  }
  func.func @transform_4(%arg0: i32) -> (i32, i32) {
    %c0_i32 = arith.constant 0 : i32
    %c0_i32_0 = arith.constant 0 : i32
    %c0_i32_1 = arith.constant 0 : i32
    return %c0_i32, %c0_i32_0 : i32, i32
  }
  func.func @transform_5(%arg0: i32) -> (i32, i32) {
    %c0_i32 = arith.constant 0 : i32
    %c0_i32_0 = arith.constant 0 : i32
    %c0_i32_1 = arith.constant 0 : i32
    return %c0_i32, %c0_i32_0 : i32, i32
  }
  func.func @transform_6(%arg0: i32) -> (i32, i32) {
    %c0_i32 = arith.constant 0 : i32
    %c0_i32_0 = arith.constant 0 : i32
    %c0_i32_1 = arith.constant 0 : i32
    return %c0_i32, %c0_i32_0 : i32, i32
  }
  func.func @transform_7(%arg0: i32) -> (i32, i32) {
    %c0_i32 = arith.constant 0 : i32
    %c0_i32_0 = arith.constant 0 : i32
    %c0_i32_1 = arith.constant 0 : i32
    return %c0_i32, %c0_i32_0 : i32, i32
  }
  func.func @transform_8(%arg0: i32) -> (i32, i32) {
    %c0_i32 = arith.constant 0 : i32
    %c0_i32_0 = arith.constant 0 : i32
    %c0_i32_1 = arith.constant 0 : i32
    return %c0_i32, %c0_i32_0 : i32, i32
  }
  func.func @transform_9(%arg0: i32) -> (i32, i32) {
    %c0_i32 = arith.constant 0 : i32
    %c0_i32_0 = arith.constant 0 : i32
    %c0_i32_1 = arith.constant 0 : i32
    return %c0_i32, %c0_i32_0 : i32, i32
  }
  func.func @transform_10(%arg0: i32) -> (i32, i32) {
    %c0_i32 = arith.constant 0 : i32
    %c0_i32_0 = arith.constant 0 : i32
    %c0_i32_1 = arith.constant 0 : i32
    return %c0_i32, %c0_i32_0 : i32, i32
  }
  func.func @transform_11(%arg0: i32) -> (i32, i32) {
    %c0_i32 = arith.constant 0 : i32
    %c0_i32_0 = arith.constant 0 : i32
    %c0_i32_1 = arith.constant 0 : i32
    return %c0_i32, %c0_i32_0 : i32, i32
  }
  func.func @transform_12(%arg0: i32) -> (i32, i32) {
    %c0_i32 = arith.constant 0 : i32
    %c0_i32_0 = arith.constant 0 : i32
    return %arg0, %c0_i32 : i32, i32
  }
}

</mosaic_0001>

<llo_original>
// kernel: tpu_custom_call.1
$region0: #{tpu_custom_call.1}
  #allocation0 [shape = 'u32[]', space=smem, size = 0x4, offset = 0x4, fixed_abs, tag = 'smem constant byte address 0x4 - core index']
  #allocation1 [shape = 'u32[144,128]{1,0:T(1,128)}', space=vmem, size = 0x12000, scoped, tag = 'internal scratch']
  #allocation2 [shape = 'bf16[16,96]{1,0:T(16,128)(2,1)}', space=vmem, size = 0x1000, scoped, tag = 'scratch operand']
  #allocation3 [shape = 'bf16[16,32]{1,0:T(16,128)(2,1)}', space=vmem, size = 0x1000, scoped, tag = 'scratch operand']
  %s0 = inlined_call_operand.vmem [shape: f32[32,32], index: 0, kind: input, shape index: {}]
  %s1 = inlined_call_operand.vmem [shape: f32[1,32], index: 1, kind: input, shape index: {}]
  %s2 = inlined_call_operand.vmem [shape: f32[1,32], index: 2, kind: input, shape index: {}]
  %s3 = inlined_call_operand.vmem [shape: bf16[32,96], index: 3, kind: input, shape index: {}]
  %s4 = inlined_call_operand.vmem [shape: bf16[32,32], index: 4, kind: input, shape index: {}]
  %s5 = inlined_call_operand.vmem [shape: f32[1,32], index: 5, kind: input, shape index: {}]
  %s6 = inlined_call_operand.vmem [shape: f32[1,32], index: 6, kind: input, shape index: {}]
  %s7 = inlined_call_operand.vmem [shape: f32[1,32], index: 7, kind: input, shape index: {}]
  %s8 = inlined_call_operand.vmem [shape: bf16[32,128], index: 8, kind: input, shape index: {}]
  %s9 = inlined_call_operand.vmem [shape: f32[1,128], index: 9, kind: input, shape index: {}]
  %s10 = inlined_call_operand.vmem [shape: bf16[128,32], index: 10, kind: input, shape index: {}]
  %s11 = inlined_call_operand.vmem [shape: f32[1,32], index: 11, kind: input, shape index: {}]
  %s12 = inlined_call_operand.hbm [shape: f32[32,32], index: 12, kind: output, shape index: {}]
  %s13 = sld [smem:[#allocation0]]
  $region81: #{tpu_custom_call.1} parent=0
    _
  %s15 = ssub.s32 1, %s13
  %s16 = scalar_select 0, %s15, %s13
  $region1: #{tpu_custom_call.1} parent=0
    #allocation4 [shape = 'u8[16384]{0}', space=vmem, size = 0x4000, scoped, tag = 'output window, operand 0']
    #allocation5 [shape = 's32[2]{0}', space=sflag, size = 0x8, scoped, tag = 'scoped memory for tpu_custom_call.1']
    %17 = vsyncpa [#allocation5], 0
    %s18 = scalar_lea.sflag [#allocation5], 1
    %19 = vsyncpa %s18, 0
    loop: start=0, step=1, limit=4
    $region2: #{tpu_custom_call.1} parent=1 // loop_pre_header
      _
    $region3: #{tpu_custom_call.1} parent=1 // loop_header
      %s21 = sphi 0, %s25
      %p22 = scmp.ge.s32.totalorder %s21, 4
      %s31 = sphi 0, %s33
      %s34 = sphi 0, %s31
      %s35 = sphi 0, %s34
      %s51 = sphi 0, %s35
      %s55 = sphi 0, %s55
      %s57 = sphi 0, %s55
      %s58 = sphi 0, %s57
      %s72 = sphi 0, %s58
      %s76 = sphi 0, %s76
      %s78 = sphi 0, %s76
      %s79 = sphi 0, %s78
      %s93 = sphi 0, %s79
      %s97 = sphi 0, %s97
      %s99 = sphi 0, %s97
      %s100 = sphi 0, %s99
      %s114 = sphi 0, %s100
      %s118 = sphi 0, %s118
      %s120 = sphi 0, %s118
      %s121 = sphi 0, %s120
      %s135 = sphi 0, %s121
      %s139 = sphi 0, %s139
      %s141 = sphi 0, %s139
      %s142 = sphi 0, %s141
      %s156 = sphi 0, %s142
      %s160 = sphi 0, %s160
      %s162 = sphi 0, %s160
      %s163 = sphi 0, %s162
      %s177 = sphi 0, %s163
      %s181 = sphi 0, %s181
      %s183 = sphi 0, %s181
      %s184 = sphi 0, %s183
      %s198 = sphi 0, %s184
      %s202 = sphi 0, %s202
      %s204 = sphi 0, %s202
      %s205 = sphi 0, %s204
      %s219 = sphi 0, %s205
      %s223 = sphi 0, %s223
      %s225 = sphi 0, %s223
      %s226 = sphi 0, %s225
      %s240 = sphi 0, %s226
      %s244 = sphi 0, %s244
      %s246 = sphi 0, %s244
      %s247 = sphi 0, %s246
      %s261 = sphi 0, %s247
      %s265 = sphi 0, %s265
      %s267 = sphi 0, %s265
      %s268 = sphi 0, %s267
      %s282 = sphi 0, %s268
      %s288 = sphi 0, %s290
      %s291 = sphi 0, %s288
      %s292 = sphi 0, %s291
      %s308 = sphi 0, %s292
    $region4: #{tpu_custom_call.1} parent=1 // loop_header_branch
      %24 = sbr.rel (%p22) target = $region8
    $region5: #{tpu_custom_call.1} parent=1 // loop_body
      %s26 = ssub.s32 %s21, 1
      %s27 = ssub.s32 %s21, 2
      %s28 = sadd.s32 %s21, 1
      %s29 = ssub.s32 %s21, %s28
      %p30 = scmp.eq.s32.totalorder %s29, 0
      %s32 = sadd.s32 %s31, 1
      %s33 = scalar_select %p30, %s31, %s32
      %p36 = pneg %p30
      %p37 = scmp.eq.s32.totalorder %s21, 1
      %p38 = por %p36, %p37
      %p39 = scmp.ne.s32.totalorder %s31, %s34
      %p40 = scmp.eq.s32.totalorder %s21, 0
      %p41 = por %p39, %p40
      %p42 = scmp.ne.s32.totalorder %s31, %s34
      %p43 = scmp.eq.s32.totalorder %s26, 1
      %p44 = por %p42, %p43
      %p45 = scmp.ne.s32.totalorder %s34, %s35
      %p46 = scmp.eq.s32.totalorder %s26, 0
      %p47 = por %p45, %p46
      %p48 = scmp.ne.s32.totalorder %s34, %s35
      %p49 = scmp.eq.s32.totalorder %s27, 1
      %p50 = por %p48, %p49
      %p52 = scmp.ne.s32.totalorder %s35, %s51
      %p53 = scmp.eq.s32.totalorder %s27, 0
      %p54 = por %p52, %p53
      %s56 = sadd.s32 %s55, 1
      %p59 = scmp.eq.s32.totalorder %s21, 1
      %p60 = scmp.ne.s32.totalorder %s55, %s57
      %p61 = scmp.eq.s32.totalorder %s21, 0
      %p62 = por %p60, %p61
      %p63 = scmp.ne.s32.totalorder %s55, %s57
      %p64 = scmp.eq.s32.totalorder %s26, 1
      %p65 = por %p63, %p64
      %p66 = scmp.ne.s32.totalorder %s57, %s58
      %p67 = scmp.eq.s32.totalorder %s26, 0
      %p68 = por %p66, %p67
      %p69 = scmp.ne.s32.totalorder %s57, %s58
      %p70 = scmp.eq.s32.totalorder %s27, 1
      %p71 = por %p69, %p70
      %p73 = scmp.ne.s32.totalorder %s58, %s72
      %p74 = scmp.eq.s32.totalorder %s27, 0
      %p75 = por %p73, %p74
      %s77 = sadd.s32 %s76, 1
      %p80 = scmp.eq.s32.totalorder %s21, 1
      %p81 = scmp.ne.s32.totalorder %s76, %s78
      %p82 = scmp.eq.s32.totalorder %s21, 0
      %p83 = por %p81, %p82
      %p84 = scmp.ne.s32.totalorder %s76, %s78
      %p85 = scmp.eq.s32.totalorder %s26, 1
      %p86 = por %p84, %p85
      %p87 = scmp.ne.s32.totalorder %s78, %s79
      %p88 = scmp.eq.s32.totalorder %s26, 0
      %p89 = por %p87, %p88
      %p90 = scmp.ne.s32.totalorder %s78, %s79
      %p91 = scmp.eq.s32.totalorder %s27, 1
      %p92 = por %p90, %p91
      %p94 = scmp.ne.s32.totalorder %s79, %s93
      %p95 = scmp.eq.s32.totalorder %s27, 0
      %p96 = por %p94, %p95
      %s98 = sadd.s32 %s97, 1
      %p101 = scmp.eq.s32.totalorder %s21, 1
      %p102 = scmp.ne.s32.totalorder %s97, %s99
      %p103 = scmp.eq.s32.totalorder %s21, 0
      %p104 = por %p102, %p103
      %p105 = scmp.ne.s32.totalorder %s97, %s99
      %p106 = scmp.eq.s32.totalorder %s26, 1
      %p107 = por %p105, %p106
      %p108 = scmp.ne.s32.totalorder %s99, %s100
      %p109 = scmp.eq.s32.totalorder %s26, 0
      %p110 = por %p108, %p109
      %p111 = scmp.ne.s32.totalorder %s99, %s100
      %p112 = scmp.eq.s32.totalorder %s27, 1
      %p113 = por %p111, %p112
      %p115 = scmp.ne.s32.totalorder %s100, %s114
      %p116 = scmp.eq.s32.totalorder %s27, 0
      %p117 = por %p115, %p116
      %s119 = sadd.s32 %s118, 1
      %p122 = scmp.eq.s32.totalorder %s21, 1
      %p123 = scmp.ne.s32.totalorder %s118, %s120
      %p124 = scmp.eq.s32.totalorder %s21, 0
      %p125 = por %p123, %p124
      %p126 = scmp.ne.s32.totalorder %s118, %s120
      %p127 = scmp.eq.s32.totalorder %s26, 1
      %p128 = por %p126, %p127
      %p129 = scmp.ne.s32.totalorder %s120, %s121
      %p130 = scmp.eq.s32.totalorder %s26, 0
      %p131 = por %p129, %p130
      %p132 = scmp.ne.s32.totalorder %s120, %s121
      %p133 = scmp.eq.s32.totalorder %s27, 1
      %p134 = por %p132, %p133
      %p136 = scmp.ne.s32.totalorder %s121, %s135
      %p137 = scmp.eq.s32.totalorder %s27, 0
      %p138 = por %p136, %p137
      %s140 = sadd.s32 %s139, 1
      %p143 = scmp.eq.s32.totalorder %s21, 1
      %p144 = scmp.ne.s32.totalorder %s139, %s141
      %p145 = scmp.eq.s32.totalorder %s21, 0
      %p146 = por %p144, %p145
      %p147 = scmp.ne.s32.totalorder %s139, %s141
      %p148 = scmp.eq.s32.totalorder %s26, 1
      %p149 = por %p147, %p148
      %p150 = scmp.ne.s32.totalorder %s141, %s142
      %p151 = scmp.eq.s32.totalorder %s26, 0
      %p152 = por %p150, %p151
      %p153 = scmp.ne.s32.totalorder %s141, %s142
      %p154 = scmp.eq.s32.totalorder %s27, 1
      %p155 = por %p153, %p154
      %p157 = scmp.ne.s32.totalorder %s142, %s156
      %p158 = scmp.eq.s32.totalorder %s27, 0
      %p159 = por %p157, %p158
      %s161 = sadd.s32 %s160, 1
      %p164 = scmp.eq.s32.totalorder %s21, 1
      %p165 = scmp.ne.s32.totalorder %s160, %s162
      %p166 = scmp.eq.s32.totalorder %s21, 0
      %p167 = por %p165, %p166
      %p168 = scmp.ne.s32.totalorder %s160, %s162
      %p169 = scmp.eq.s32.totalorder %s26, 1
      %p170 = por %p168, %p169
      %p171 = scmp.ne.s32.totalorder %s162, %s163
      %p172 = scmp.eq.s32.totalorder %s26, 0
      %p173 = por %p171, %p172
      %p174 = scmp.ne.s32.totalorder %s162, %s163
      %p175 = scmp.eq.s32.totalorder %s27, 1
      %p176 = por %p174, %p175
      %p178 = scmp.ne.s32.totalorder %s163, %s177
      %p179 = scmp.eq.s32.totalorder %s27, 0
      %p180 = por %p178, %p179
      %s182 = sadd.s32 %s181, 1
      %p185 = scmp.eq.s32.totalorder %s21, 1
      %p186 = scmp.ne.s32.totalorder %s181, %s183
      %p187 = scmp.eq.s32.totalorder %s21, 0
      %p188 = por %p186, %p187
      %p189 = scmp.ne.s32.totalorder %s181, %s183
      %p190 = scmp.eq.s32.totalorder %s26, 1
      %p191 = por %p189, %p190
      %p192 = scmp.ne.s32.totalorder %s183, %s184
      %p193 = scmp.eq.s32.totalorder %s26, 0
      %p194 = por %p192, %p193
      %p195 = scmp.ne.s32.totalorder %s183, %s184
      %p196 = scmp.eq.s32.totalorder %s27, 1
      %p197 = por %p195, %p196
      %p199 = scmp.ne.s32.totalorder %s184, %s198
      %p200 = scmp.eq.s32.totalorder %s27, 0
      %p201 = por %p199, %p200
      %s203 = sadd.s32 %s202, 1
      %p206 = scmp.eq.s32.totalorder %s21, 1
      %p207 = scmp.ne.s32.totalorder %s202, %s204
      %p208 = scmp.eq.s32.totalorder %s21, 0
      %p209 = por %p207, %p208
      %p210 = scmp.ne.s32.totalorder %s202, %s204
      %p211 = scmp.eq.s32.totalorder %s26, 1
      %p212 = por %p210, %p211
      %p213 = scmp.ne.s32.totalorder %s204, %s205
      %p214 = scmp.eq.s32.totalorder %s26, 0
      %p215 = por %p213, %p214
      %p216 = scmp.ne.s32.totalorder %s204, %s205
      %p217 = scmp.eq.s32.totalorder %s27, 1
      %p218 = por %p216, %p217
      %p220 = scmp.ne.s32.totalorder %s205, %s219
      %p221 = scmp.eq.s32.totalorder %s27, 0
      %p222 = por %p220, %p221
      %s224 = sadd.s32 %s223, 1
      %p227 = scmp.eq.s32.totalorder %s21, 1
      %p228 = scmp.ne.s32.totalorder %s223, %s225
      %p229 = scmp.eq.s32.totalorder %s21, 0
      %p230 = por %p228, %p229
      %p231 = scmp.ne.s32.totalorder %s223, %s225
      %p232 = scmp.eq.s32.totalorder %s26, 1
      %p233 = por %p231, %p232
      %p234 = scmp.ne.s32.totalorder %s225, %s226
      %p235 = scmp.eq.s32.totalorder %s26, 0
      %p236 = por %p234, %p235
      %p237 = scmp.ne.s32.totalorder %s225, %s226
      %p238 = scmp.eq.s32.totalorder %s27, 1
      %p239 = por %p237, %p238
      %p241 = scmp.ne.s32.totalorder %s226, %s240
      %p242 = scmp.eq.s32.totalorder %s27, 0
      %p243 = por %p241, %p242
      %s245 = sadd.s32 %s244, 1
      %p248 = scmp.eq.s32.totalorder %s21, 1
      %p249 = scmp.ne.s32.totalorder %s244, %s246
      %p250 = scmp.eq.s32.totalorder %s21, 0
      %p251 = por %p249, %p250
      %p252 = scmp.ne.s32.totalorder %s244, %s246
      %p253 = scmp.eq.s32.totalorder %s26, 1
      %p254 = por %p252, %p253
      %p255 = scmp.ne.s32.totalorder %s246, %s247
      %p256 = scmp.eq.s32.totalorder %s26, 0
      %p257 = por %p255, %p256
      %p258 = scmp.ne.s32.totalorder %s246, %s247
      %p259 = scmp.eq.s32.totalorder %s27, 1
      %p260 = por %p258, %p259
      %p262 = scmp.ne.s32.totalorder %s247, %s261
      %p263 = scmp.eq.s32.totalorder %s27, 0
      %p264 = por %p262, %p263
      %s266 = sadd.s32 %s265, 1
      %p269 = scmp.eq.s32.totalorder %s21, 1
      %p270 = scmp.ne.s32.totalorder %s265, %s267
      %p271 = scmp.eq.s32.totalorder %s21, 0
      %p272 = por %p270, %p271
      %p273 = scmp.ne.s32.totalorder %s265, %s267
      %p274 = scmp.eq.s32.totalorder %s26, 1
      %p275 = por %p273, %p274
      %p276 = scmp.ne.s32.totalorder %s267, %s268
      %p277 = scmp.eq.s32.totalorder %s26, 0
      %p278 = por %p276, %p277
      %p279 = scmp.ne.s32.totalorder %s267, %s268
      %p280 = scmp.eq.s32.totalorder %s27, 1
      %p281 = por %p279, %p280
      %p283 = scmp.ne.s32.totalorder %s268, %s282
      %p284 = scmp.eq.s32.totalorder %s27, 0
      %p285 = por %p283, %p284
      %s286 = ssub.s32 %s21, %s28
      %p287 = scmp.eq.s32.totalorder %s286, 0
      %s289 = sadd.s32 %s288, 1
      %s290 = scalar_select %p287, %s288, %s289
      %p293 = pneg %p287
      %p294 = scmp.eq.s32.totalorder %s21, 1
      %p295 = por %p293, %p294
      %p296 = scmp.ne.s32.totalorder %s288, %s291
      %p297 = scmp.eq.s32.totalorder %s21, 0
      %p298 = por %p296, %p297
      %p299 = scmp.ne.s32.totalorder %s288, %s291
      %p300 = scmp.eq.s32.totalorder %s26, 1
      %p301 = por %p299, %p300
      %p302 = scmp.ne.s32.totalorder %s291, %s292
      %p303 = scmp.eq.s32.totalorder %s26, 0
      %p304 = por %p302, %p303
      %p305 = scmp.ne.s32.totalorder %s291, %s292
      %p306 = scmp.eq.s32.totalorder %s27, 1
      %p307 = por %p305, %p306
      %p309 = scmp.ne.s32.totalorder %s292, %s308
      %p310 = scmp.eq.s32.totalorder %s27, 0
      %p311 = por %p309, %p310
      %p312 = scmp.le.s32.totalorder 1, %s21
      %p313 = scmp.lt.s32.totalorder %s21, 3
      %p314 = pnand %p312, %p313
      %p315 = pneg %p314
      // Predicated region
      $region9: #{tpu_custom_call.1} parent=5 // pred_check
        _
      $region10: #{tpu_custom_call.1} parent=5 // pred_check_branch
        %317 = sbr.rel (%p314) target = $region12
      $region11: #{tpu_custom_call.1} parent=5 // pred_region
        %s318 = ssub.s32 %s21, 1
        // Predicated region
        $region13: #{tpu_custom_call.1} parent=11 // pred_check
          %p319 = pneg %p68
        $region14: #{tpu_custom_call.1} parent=11 // pred_check_branch
          %321 = sbr.rel (%p319) target = $region16
        $region15: #{tpu_custom_call.1} parent=11 // pred_region
          _
        $region16: #{tpu_custom_call.1} parent=11 // pred_fallthru
          _
        // Predicated region
        $region17: #{tpu_custom_call.1} parent=11 // pred_check
          %p322 = pneg %p89
        $region18: #{tpu_custom_call.1} parent=11 // pred_check_branch
          %324 = sbr.rel (%p322) target = $region20
        $region19: #{tpu_custom_call.1} parent=11 // pred_region
          _
        $region20: #{tpu_custom_call.1} parent=11 // pred_fallthru
          _
        // Predicated region
        $region21: #{tpu_custom_call.1} parent=11 // pred_check
          %p325 = pneg %p110
        $region22: #{tpu_custom_call.1} parent=11 // pred_check_branch
          %327 = sbr.rel (%p325) target = $region24
        $region23: #{tpu_custom_call.1} parent=11 // pred_region
          _
        $region24: #{tpu_custom_call.1} parent=11 // pred_fallthru
          _
        // Predicated region
        $region25: #{tpu_custom_call.1} parent=11 // pred_check
          %p328 = pneg %p131
        $region26: #{tpu_custom_call.1} parent=11 // pred_check_branch
          %330 = sbr.rel (%p328) target = $region28
        $region27: #{tpu_custom_call.1} parent=11 // pred_region
          _
        $region28: #{tpu_custom_call.1} parent=11 // pred_fallthru
          _
        // Predicated region
        $region29: #{tpu_custom_call.1} parent=11 // pred_check
          %p331 = pneg %p152
        $region30: #{tpu_custom_call.1} parent=11 // pred_check_branch
          %333 = sbr.rel (%p331) target = $region32
        $region31: #{tpu_custom_call.1} parent=11 // pred_region
          _
        $region32: #{tpu_custom_call.1} parent=11 // pred_fallthru
          _
        // Predicated region
        $region33: #{tpu_custom_call.1} parent=11 // pred_check
          %p334 = pneg %p173
        $region34: #{tpu_custom_call.1} parent=11 // pred_check_branch
          %336 = sbr.rel (%p334) target = $region36
        $region35: #{tpu_custom_call.1} parent=11 // pred_region
          _
        $region36: #{tpu_custom_call.1} parent=11 // pred_fallthru
          _
        // Predicated region
        $region37: #{tpu_custom_call.1} parent=11 // pred_check
          %p337 = pneg %p194
        $region38: #{tpu_custom_call.1} parent=11 // pred_check_branch
          %339 = sbr.rel (%p337) target = $region40
        $region39: #{tpu_custom_call.1} parent=11 // pred_region
          _
        $region40: #{tpu_custom_call.1} parent=11 // pred_fallthru
          _
        // Predicated region
        $region41: #{tpu_custom_call.1} parent=11 // pred_check
          %p340 = pneg %p215
        $region42: #{tpu_custom_call.1} parent=11 // pred_check_branch
          %342 = sbr.rel (%p340) target = $region44
        $region43: #{tpu_custom_call.1} parent=11 // pred_region
          _
        $region44: #{tpu_custom_call.1} parent=11 // pred_fallthru
          _
        // Predicated region
        $region45: #{tpu_custom_call.1} parent=11 // pred_check
          %p343 = pneg %p236
        $region46: #{tpu_custom_call.1} parent=11 // pred_check_branch
          %345 = sbr.rel (%p343) target = $region48
        $region47: #{tpu_custom_call.1} parent=11 // pred_region
          _
        $region48: #{tpu_custom_call.1} parent=11 // pred_fallthru
          _
        // Predicated region
        $region49: #{tpu_custom_call.1} parent=11 // pred_check
          %p346 = pneg %p257
        $region50: #{tpu_custom_call.1} parent=11 // pred_check_branch
          %348 = sbr.rel (%p346) target = $region52
        $region51: #{tpu_custom_call.1} parent=11 // pred_region
          _
        $region52: #{tpu_custom_call.1} parent=11 // pred_fallthru
          _
        // Predicated region
        $region53: #{tpu_custom_call.1} parent=11 // pred_check
          %p349 = pneg %p278
        $region54: #{tpu_custom_call.1} parent=11 // pred_check_branch
          %351 = sbr.rel (%p349) target = $region56
        $region55: #{tpu_custom_call.1} parent=11 // pred_region
          _
        $region56: #{tpu_custom_call.1} parent=11 // pred_fallthru
          _
      $region12: #{tpu_custom_call.1} parent=5 // pred_fallthru
        _
      %p352 = scmp.lt.s32.totalorder %s21, 2
      // Predicated region
      $region57: #{tpu_custom_call.1} parent=5 // pred_check
        %p353 = pneg %p352
      $region58: #{tpu_custom_call.1} parent=5 // pred_check_branch
        %355 = sbr.rel (%p353) target = $region60
      $region59: #{tpu_custom_call.1} parent=5 // pred_region
        // Predicated region
        $region61: #{tpu_custom_call.1} parent=59 // pred_check
          %p356 = pneg %p41
        $region62: #{tpu_custom_call.1} parent=59 // pred_check_branch
          %358 = sbr.rel (%p356) target = $region64
        $region63: #{tpu_custom_call.1} parent=59 // pred_region
          %s359 = smul.u32 2, %s21
          %p360 = scmp.lt.s32.totalorder %s359, 3
          %s361 = scalar_select %p360, %s359, 3
          %s362 = smul.addr %s361, 8
          %s363 = scalar_lea.vmem %s0, %s362
          %s364 = smul.u32 2, %s21
        $region64: #{tpu_custom_call.1} parent=59 // pred_fallthru
          _
      $region60: #{tpu_custom_call.1} parent=5 // pred_fallthru
        _
      %p365 = scmp.le.s32.totalorder 1, %s21
      %p366 = scmp.lt.s32.totalorder %s21, 3
      %p367 = pnand %p365, %p366
      %p368 = pneg %p367
      // Predicated region
      $region65: #{tpu_custom_call.1} parent=5 // pred_check
        _
      $region66: #{tpu_custom_call.1} parent=5 // pred_check_branch
        %370 = sbr.rel (%p367) target = $region68
      $region67: #{tpu_custom_call.1} parent=5 // pred_region
        %s371 = ssub.s32 %s21, 1
        %s372 = smul.u32 2, %s26
        %p373 = scmp.lt.s32.totalorder %s372, 3
        %s374 = scalar_select %p373, %s372, 3
        %s375 = smul.addr %s374, 8
        %s376 = scalar_lea.vmem %s0, %s375
        %p377 = pneg %p47
        %p378 = pneg %p44
        %p379 = pneg %p68
        %p380 = pneg %p65
        %p381 = pneg %p89
        %p382 = pneg %p86
        %p383 = pneg %p110
        %p384 = pneg %p107
        %p385 = pneg %p131
        %p386 = pneg %p128
        %p387 = pneg %p152
        %p388 = pneg %p149
        %p389 = pneg %p173
        %p390 = pneg %p170
        %p391 = pneg %p194
        %p392 = pneg %p191
        %p393 = pneg %p215
        %p394 = pneg %p212
        %p395 = pneg %p236
        %p396 = pneg %p233
        %p397 = pneg %p257
        %p398 = pneg %p254
        %p399 = pneg %p278
        %p400 = pneg %p275
        %p401 = pneg %p304
        %p402 = pneg %p301
        %s403 = sand.u32 %s291, 1
        %s404 = scalar_lea.sflag [#allocation5], %s403
        %s405 = sand.u32 %s291, 1
        %s406 = smul.addr %s405, 16
        %s407 = scalar_lea.vmem [#allocation4], %s406
        %s408 = smul.u32 2, %s26
        %p409 = scmp.lt.s32.totalorder %s408, 3
        %s410 = scalar_select %p409, %s408, 3
        %s411 = smul.addr %s410, 8
        %s412 = scalar_lea.vmem %s0, %s411
        %s413 = smul.u32 2, %s26
        %s414 = smul.u32 2, %s26
        %v416 = vld [vmem:[%s412] sm:$0xff]
        %v417 = vld [vmem:[%s412 + $0x8] sm:$0xff]
        %v418 = vld [vmem:[%s1] sm:$0x1]
        %v419 = vld [vmem:[%s2] sm:$0x1]
        %vm420 = vcmask 261120
        %v421 = vsel %vm420, %v416, 0.0
        %422 = vadd.xlane.f32.xlu0 %v421
        %v423 = vpop.xlane.xlu0 %422
        %v424 = vsel %vm420, %v417, 0.0
        %425 = vadd.xlane.f32.xlu0 %v424
        %v426 = vpop.xlane.xlu0 %425
        %v427 = vrcp.pop 32.0
        %v428 = vmul.f32 %v423, %v427
        %v429 = vmul.f32 %v426, %v427
        %v430 = vsub.f32 %v416, %v428
        %v431 = vsub.f32 %v417, %v429
        %v432 = vmul.f32 %v430, %v430
        %v433 = vmul.f32 %v431, %v431
        %v434 = vsel %vm420, %v432, 0.0
        %435 = vadd.xlane.f32.xlu0 %v434
        %v436 = vpop.xlane.xlu0 %435
        %v437 = vsel %vm420, %v433, 0.0
        %438 = vadd.xlane.f32.xlu0 %v437
        %v439 = vpop.xlane.xlu0 %438
        %v440 = vmul.f32 %v436, %v427
        %v441 = vmul.f32 %v439, %v427
        %v442 = vadd.f32 %v440, 1e-05
        %v443 = vadd.f32 %v441, 1e-05
        %v444 = vrsqrt.pop %v442
        %v445 = vrsqrt.pop %v443
        %v446 = vmul.f32 %v430, %v444
        %v447 = vmul.f32 %v431, %v445
        %v449 = vlaneseq
        %v450 = vshrl.u32 %v449, 7
        %v451 = vsub.s32 0, %v450
        %v452 = vrot.slane %v418, %v451
        %v454 = vmul.f32 %v446, %v452
        %v455 = vmul.f32 %v447, %v452
        %v457 = vlaneseq
        %v458 = vshrl.u32 %v457, 7
        %v459 = vsub.s32 0, %v458
        %v460 = vrot.slane %v419, %v459
        %v462 = vadd.f32 %v454, %v460
        %v463 = vadd.f32 %v455, %v460
        %v464 = vpack.c.bf16 %v463, %v462
        %v465 = vld [vmem:[%s3] sm:$0xf]
        %v466 = vld [vmem:[%s3 + $0x4] sm:$0xf]
        %v467 = vld [vmem:[%s3 + $0x8] sm:$0xf]
        %v468 = vld [vmem:[%s3 + $0xc] sm:$0xf]
        %v473 = vunpack.c.l.b16 %v465
        %v474 = vunpack.c.l.b16 %v466
        %v475 = vunpack.c.l.b16 %v467
        %v476 = vunpack.c.l.b16 %v468
        %v477 = vpack.c.b16 %v474, %v473
        %v478 = vpack.c.b16 %v476, %v475
        %v482 = vsel %vm420, %v464, 0
        %484 = vmatprep.subr.bf16.mxu0 0
        %485 = vmatpush1.bf16.msra.mxu0 %v477
        %486 = vmatprep.subr.bf16.mxu0 0
        %487 = vmatpush1.bf16.msra.mxu0 %v478
        %488 = vmatprep.subr.bf16.mxu0 0
        %489 = vmatpush1.bf16.msra.mxu0 0
        %490 = vmatprep.subr.bf16.mxu0 0
        %491 = vmatpush1.bf16.msra.mxu0 0
        %492 = vmatprep.subr.bf16.mxu0 0
        %493 = vmatpush1.bf16.msra.mxu0 0
        %494 = vmatprep.subr.bf16.mxu0 0
        %495 = vmatpush1.bf16.msra.mxu0 0
        %496 = vmatprep.subr.bf16.mxu0 0
        %497 = vmatpush1.bf16.msra.mxu0 0
        %498 = vmatprep.subr.bf16.mxu0 0
        %499 = vmatpush1.bf16.msra.mxu0 0
        %500 = vmatprep.subr.bf16.mxu0 0
        %501 = vmatpush1.bf16.msra.mxu0 0
        %502 = vmatprep.subr.bf16.mxu0 0
        %503 = vmatpush1.bf16.msra.mxu0 0
        %504 = vmatprep.subr.bf16.mxu0 0
        %505 = vmatpush1.bf16.msra.mxu0 0
        %506 = vmatprep.subr.bf16.mxu0 0
        %507 = vmatpush1.bf16.msra.mxu0 0
        %508 = vmatprep.subr.bf16.mxu0 0
        %509 = vmatpush1.bf16.msra.mxu0 0
        %510 = vmatprep.subr.bf16.mxu0 0
        %511 = vmatpush1.bf16.msra.mxu0 0
        %512 = vmatprep.subr.bf16.mxu0 0
        %513 = vmatpush1.bf16.msra.mxu0 0
        %514 = vmatprep.subr.bf16.mxu0 0
        %515 = vmatpush1.bf16.msra.mxu0 0
        %516 = vmatprep.mubr.bf16.mxu0 0
        %517 = vmatmul.mubr.bf16.gmra.mrb[0].mxu0 %v482
        %v518 = vpop.f32.mrb[0].mxu0
        %v519 = vadd.f32 0.0, %v518
        %v520 = vpop.f32.mrb[0].mxu0
        %v521 = vpop.f32.mrb[0].mxu0
        %v522 = vadd.f32 0.0, %v521
        %v523 = vpop.f32.mrb[0].mxu0
        %524 = vdwg.mxu0
        %v525 = vpack.c.bf16 %v522, %v519
        %vm526 = vcmask 785408
        %527 = vst.msk [vmem:[#allocation2] sm:$0xff] %vm526, %v525
        %v528 = vld [vmem:[#allocation2] sm:$0xf]
        %530 = vrot.lane.b32.xlu0 %v528, 96
        %v531 = vpop.permute.xlu0 %530
        %vm532 = vcmask 64512
        %v534 = vsel %vm532, %v528, 0
        %v537 = vsel %vm532, %v531, 0
        %539 = vmatprep.subr.bf16.mxu0 0
        %540 = vmatpush1.bf16.xpose.msra.mxu0 %v537
        %541 = vmatprep.subr.bf16.mxu0 0
        %542 = vmatpush1.bf16.xpose.msra.mxu0 0
        %543 = vmatprep.subr.bf16.mxu0 0
        %544 = vmatpush1.bf16.xpose.msra.mxu0 0
        %545 = vmatprep.subr.bf16.mxu0 0
        %546 = vmatpush1.bf16.xpose.msra.mxu0 0
        %547 = vmatprep.subr.bf16.mxu0 0
        %548 = vmatpush1.bf16.xpose.msra.mxu0 0
        %549 = vmatprep.subr.bf16.mxu0 0
        %550 = vmatpush1.bf16.xpose.msra.mxu0 0
        %551 = vmatprep.subr.bf16.mxu0 0
        %552 = vmatpush1.bf16.xpose.msra.mxu0 0
        %553 = vmatprep.subr.bf16.mxu0 0
        %554 = vmatpush1.bf16.xpose.msra.mxu0 0
        %555 = vmatprep.subr.bf16.mxu0 0
        %556 = vmatpush1.bf16.xpose.msra.mxu0 0
        %557 = vmatprep.subr.bf16.mxu0 0
        %558 = vmatpush1.bf16.xpose.msra.mxu0 0
        %559 = vmatprep.subr.bf16.mxu0 0
        %560 = vmatpush1.bf16.xpose.msra.mxu0 0
        %561 = vmatprep.subr.bf16.mxu0 0
        %562 = vmatpush1.bf16.xpose.msra.mxu0 0
        %563 = vmatprep.subr.bf16.mxu0 0
        %564 = vmatpush1.bf16.xpose.msra.mxu0 0
        %565 = vmatprep.subr.bf16.mxu0 0
        %566 = vmatpush1.bf16.xpose.msra.mxu0 0
        %567 = vmatprep.subr.bf16.mxu0 0
        %568 = vmatpush1.bf16.xpose.msra.mxu0 0
        %569 = vmatprep.subr.bf16.mxu0 0
        %570 = vmatpush1.bf16.xpose.msra.mxu0 0
        %571 = vmatprep.mubr.bf16.mxu0 0
        %572 = vmatmul.mubr.bf16.gmra.mrb[0].mxu0 %v534
        %v573 = vpop.f32.mrb[0].mxu0
        %v574 = vadd.f32 0.0, %v573
        %v575 = vpop.f32.mrb[0].mxu0
        %v576 = vpop.f32.mrb[0].mxu0
        %v577 = vpop.f32.mrb[0].mxu0
        %578 = vdwg.mxu0
        %v579 = vmul.f32 %v574, 0.35355338
        %v580 = vsel %vm532, %v579, -inf
        %581 = vmax.xlane.f32.xlu0 %v580
        %v582 = vpop.xlane.xlu0 %581
        %v583 = vsub.f32 %v579, %v582
        %v584 = vmul.f32 %v583, 1.442695
        %v585 = vpow.pop %v584
        %v586 = vsel %vm532, %v585, 0.0
        %587 = vadd.xlane.f32.xlu0 %v586
        %v588 = vpop.xlane.xlu0 %587
        %v589 = vrcp.pop %v588
        %v590 = vmul.f32 %v585, %v589
        %v591 = vpack.c.bf16 %v590, %v590
        %592 = vrot.lane.b32.xlu0 %v528, 64
        %v593 = vpop.permute.xlu0 %592
        %v595 = vsel %vm532, %v591, 0
        %vm597 = vcmask 1043456
        %v599 = vsel %vm597, %v593, 0
        %601 = vmatprep.subr.bf16.mxu0 0
        %602 = vmatpush1.bf16.msra.mxu0 %v599
        %603 = vmatprep.subr.bf16.mxu0 0
        %604 = vmatpush1.bf16.msra.mxu0 0
        %605 = vmatprep.subr.bf16.mxu0 0
        %606 = vmatpush1.bf16.msra.mxu0 0
        %607 = vmatprep.subr.bf16.mxu0 0
        %608 = vmatpush1.bf16.msra.mxu0 0
        %609 = vmatprep.subr.bf16.mxu0 0
        %610 = vmatpush1.bf16.msra.mxu0 0
        %611 = vmatprep.subr.bf16.mxu0 0
        %612 = vmatpush1.bf16.msra.mxu0 0
        %613 = vmatprep.subr.bf16.mxu0 0
        %614 = vmatpush1.bf16.msra.mxu0 0
        %615 = vmatprep.subr.bf16.mxu0 0
        %616 = vmatpush1.bf16.msra.mxu0 0
        %617 = vmatprep.subr.bf16.mxu0 0
        %618 = vmatpush1.bf16.msra.mxu0 0
        %619 = vmatprep.subr.bf16.mxu0 0
        %620 = vmatpush1.bf16.msra.mxu0 0
        %621 = vmatprep.subr.bf16.mxu0 0
        %622 = vmatpush1.bf16.msra.mxu0 0
        %623 = vmatprep.subr.bf16.mxu0 0
        %624 = vmatpush1.bf16.msra.mxu0 0
        %625 = vmatprep.subr.bf16.mxu0 0
        %626 = vmatpush1.bf16.msra.mxu0 0
        %627 = vmatprep.subr.bf16.mxu0 0
        %628 = vmatpush1.bf16.msra.mxu0 0
        %629 = vmatprep.subr.bf16.mxu0 0
        %630 = vmatpush1.bf16.msra.mxu0 0
        %631 = vmatprep.subr.bf16.mxu0 0
        %632 = vmatpush1.bf16.msra.mxu0 0
        %633 = vmatprep.mubr.bf16.mxu0 0
        %634 = vmatmul.mubr.bf16.gmra.mrb[0].mxu0 %v595
        %v635 = vpop.f32.mrb[0].mxu0
        %v636 = vadd.f32 0.0, %v635
        %v637 = vpop.f32.mrb[0].mxu0
        %v638 = vpop.f32.mrb[0].mxu0
        %v639 = vpop.f32.mrb[0].mxu0
        %640 = vdwg.mxu0
        %v641 = vpack.c.bf16 %v636, %v636
        %642 = vrot.lane.b32.xlu0 %v528, 120
        %v643 = vpop.permute.xlu0 %642
        %644 = vrot.lane.b32.xlu0 %v528, 88
        %v645 = vpop.permute.xlu0 %644
        %v647 = vsel %vm532, %v643, 0
        %v650 = vsel %vm532, %v645, 0
        %652 = vmatprep.subr.bf16.mxu0 0
        %653 = vmatpush1.bf16.xpose.msra.mxu0 %v650
        %654 = vmatprep.subr.bf16.mxu0 0
        %655 = vmatpush1.bf16.xpose.msra.mxu0 0
        %656 = vmatprep.subr.bf16.mxu0 0
        %657 = vmatpush1.bf16.xpose.msra.mxu0 0
        %658 = vmatprep.subr.bf16.mxu0 0
        %659 = vmatpush1.bf16.xpose.msra.mxu0 0
        %660 = vmatprep.subr.bf16.mxu0 0
        %661 = vmatpush1.bf16.xpose.msra.mxu0 0
        %662 = vmatprep.subr.bf16.mxu0 0
        %663 = vmatpush1.bf16.xpose.msra.mxu0 0
        %664 = vmatprep.subr.bf16.mxu0 0
        %665 = vmatpush1.bf16.xpose.msra.mxu0 0
        %666 = vmatprep.subr.bf16.mxu0 0
        %667 = vmatpush1.bf16.xpose.msra.mxu0 0
        %668 = vmatprep.subr.bf16.mxu0 0
        %669 = vmatpush1.bf16.xpose.msra.mxu0 0
        %670 = vmatprep.subr.bf16.mxu0 0
        %671 = vmatpush1.bf16.xpose.msra.mxu0 0
        %672 = vmatprep.subr.bf16.mxu0 0
        %673 = vmatpush1.bf16.xpose.msra.mxu0 0
        %674 = vmatprep.subr.bf16.mxu0 0
        %675 = vmatpush1.bf16.xpose.msra.mxu0 0
        %676 = vmatprep.subr.bf16.mxu0 0
        %677 = vmatpush1.bf16.xpose.msra.mxu0 0
        %678 = vmatprep.subr.bf16.mxu0 0
        %679 = vmatpush1.bf16.xpose.msra.mxu0 0
        %680 = vmatprep.subr.bf16.mxu0 0
        %681 = vmatpush1.bf16.xpose.msra.mxu0 0
        %682 = vmatprep.subr.bf16.mxu0 0
        %683 = vmatpush1.bf16.xpose.msra.mxu0 0
        %684 = vmatprep.mubr.bf16.mxu0 0
        %685 = vmatmul.mubr.bf16.gmra.mrb[0].mxu0 %v647
        %v686 = vpop.f32.mrb[0].mxu0
        %v687 = vadd.f32 0.0, %v686
        %v688 = vpop.f32.mrb[0].mxu0
        %v689 = vpop.f32.mrb[0].mxu0
        %v690 = vpop.f32.mrb[0].mxu0
        %691 = vdwg.mxu0
        %v692 = vmul.f32 %v687, 0.35355338
        %v693 = vsel %vm532, %v692, -inf
        %694 = vmax.xlane.f32.xlu0 %v693
        %v695 = vpop.xlane.xlu0 %694
        %v696 = vsub.f32 %v692, %v695
        %v697 = vmul.f32 %v696, 1.442695
        %v698 = vpow.pop %v697
        %v699 = vsel %vm532, %v698, 0.0
        %700 = vadd.xlane.f32.xlu0 %v699
        %v701 = vpop.xlane.xlu0 %700
        %v702 = vrcp.pop %v701
        %v703 = vmul.f32 %v698, %v702
        %v704 = vpack.c.bf16 %v703, %v703
        %705 = vrot.lane.b32.xlu0 %v528, 56
        %v706 = vpop.permute.xlu0 %705
        %v708 = vsel %vm532, %v704, 0
        %v711 = vsel %vm597, %v706, 0
        %713 = vmatprep.subr.bf16.mxu0 0
        %714 = vmatpush1.bf16.msra.mxu0 %v711
        %715 = vmatprep.subr.bf16.mxu0 0
        %716 = vmatpush1.bf16.msra.mxu0 0
        %717 = vmatprep.subr.bf16.mxu0 0
        %718 = vmatpush1.bf16.msra.mxu0 0
        %719 = vmatprep.subr.bf16.mxu0 0
        %720 = vmatpush1.bf16.msra.mxu0 0
        %721 = vmatprep.subr.bf16.mxu0 0
        %722 = vmatpush1.bf16.msra.mxu0 0
        %723 = vmatprep.subr.bf16.mxu0 0
        %724 = vmatpush1.bf16.msra.mxu0 0
        %725 = vmatprep.subr.bf16.mxu0 0
        %726 = vmatpush1.bf16.msra.mxu0 0
        %727 = vmatprep.subr.bf16.mxu0 0
        %728 = vmatpush1.bf16.msra.mxu0 0
        %729 = vmatprep.subr.bf16.mxu0 0
        %730 = vmatpush1.bf16.msra.mxu0 0
        %731 = vmatprep.subr.bf16.mxu0 0
        %732 = vmatpush1.bf16.msra.mxu0 0
        %733 = vmatprep.subr.bf16.mxu0 0
        %734 = vmatpush1.bf16.msra.mxu0 0
        %735 = vmatprep.subr.bf16.mxu0 0
        %736 = vmatpush1.bf16.msra.mxu0 0
        %737 = vmatprep.subr.bf16.mxu0 0
        %738 = vmatpush1.bf16.msra.mxu0 0
        %739 = vmatprep.subr.bf16.mxu0 0
        %740 = vmatpush1.bf16.msra.mxu0 0
        %741 = vmatprep.subr.bf16.mxu0 0
        %742 = vmatpush1.bf16.msra.mxu0 0
        %743 = vmatprep.subr.bf16.mxu0 0
        %744 = vmatpush1.bf16.msra.mxu0 0
        %745 = vmatprep.mubr.bf16.mxu0 0
        %746 = vmatmul.mubr.bf16.gmra.mrb[0].mxu0 %v708
        %v747 = vpop.f32.mrb[0].mxu0
        %v748 = vadd.f32 0.0, %v747
        %v749 = vpop.f32.mrb[0].mxu0
        %v750 = vpop.f32.mrb[0].mxu0
        %v751 = vpop.f32.mrb[0].mxu0
        %752 = vdwg.mxu0
        %v753 = vpack.c.bf16 %v748, %v748
        %754 = vrot.lane.b32.xlu0 %v528, 112
        %v755 = vpop.permute.xlu0 %754
        %756 = vrot.lane.b32.xlu0 %v528, 80
        %v757 = vpop.permute.xlu0 %756
        %v759 = vsel %vm532, %v755, 0
        %v762 = vsel %vm532, %v757, 0
        %764 = vmatprep.subr.bf16.mxu0 0
        %765 = vmatpush1.bf16.xpose.msra.mxu0 %v762
        %766 = vmatprep.subr.bf16.mxu0 0
        %767 = vmatpush1.bf16.xpose.msra.mxu0 0
        %768 = vmatprep.subr.bf16.mxu0 0
        %769 = vmatpush1.bf16.xpose.msra.mxu0 0
        %770 = vmatprep.subr.bf16.mxu0 0
        %771 = vmatpush1.bf16.xpose.msra.mxu0 0
        %772 = vmatprep.subr.bf16.mxu0 0
        %773 = vmatpush1.bf16.xpose.msra.mxu0 0
        %774 = vmatprep.subr.bf16.mxu0 0
        %775 = vmatpush1.bf16.xpose.msra.mxu0 0
        %776 = vmatprep.subr.bf16.mxu0 0
        %777 = vmatpush1.bf16.xpose.msra.mxu0 0
        %778 = vmatprep.subr.bf16.mxu0 0
        %779 = vmatpush1.bf16.xpose.msra.mxu0 0
        %780 = vmatprep.subr.bf16.mxu0 0
        %781 = vmatpush1.bf16.xpose.msra.mxu0 0
        %782 = vmatprep.subr.bf16.mxu0 0
        %783 = vmatpush1.bf16.xpose.msra.mxu0 0
        %784 = vmatprep.subr.bf16.mxu0 0
        %785 = vmatpush1.bf16.xpose.msra.mxu0 0
        %786 = vmatprep.subr.bf16.mxu0 0
        %787 = vmatpush1.bf16.xpose.msra.mxu0 0
        %788 = vmatprep.subr.bf16.mxu0 0
        %789 = vmatpush1.bf16.xpose.msra.mxu0 0
        %790 = vmatprep.subr.bf16.mxu0 0
        %791 = vmatpush1.bf16.xpose.msra.mxu0 0
        %792 = vmatprep.subr.bf16.mxu0 0
        %793 = vmatpush1.bf16.xpose.msra.mxu0 0
        %794 = vmatprep.subr.bf16.mxu0 0
        %795 = vmatpush1.bf16.xpose.msra.mxu0 0
        %796 = vmatprep.mubr.bf16.mxu0 0
        %797 = vmatmul.mubr.bf16.gmra.mrb[0].mxu0 %v759
        %v798 = vpop.f32.mrb[0].mxu0
        %v799 = vadd.f32 0.0, %v798
        %v800 = vpop.f32.mrb[0].mxu0
        %v801 = vpop.f32.mrb[0].mxu0
        %v802 = vpop.f32.mrb[0].mxu0
        %803 = vdwg.mxu0
        %v804 = vmul.f32 %v799, 0.35355338
        %v805 = vsel %vm532, %v804, -inf
        %806 = vmax.xlane.f32.xlu0 %v805
        %v807 = vpop.xlane.xlu0 %806
        %v808 = vsub.f32 %v804, %v807
        %v809 = vmul.f32 %v808, 1.442695
        %v810 = vpow.pop %v809
        %v811 = vsel %vm532, %v810, 0.0
        %812 = vadd.xlane.f32.xlu0 %v811
        %v813 = vpop.xlane.xlu0 %812
        %v814 = vrcp.pop %v813
        %v815 = vmul.f32 %v810, %v814
        %v816 = vpack.c.bf16 %v815, %v815
        %817 = vrot.lane.b32.xlu0 %v528, 48
        %v818 = vpop.permute.xlu0 %817
        %v820 = vsel %vm532, %v816, 0
        %v823 = vsel %vm597, %v818, 0
        %825 = vmatprep.subr.bf16.mxu0 0
        %826 = vmatpush1.bf16.msra.mxu0 %v823
        %827 = vmatprep.subr.bf16.mxu0 0
        %828 = vmatpush1.bf16.msra.mxu0 0
        %829 = vmatprep.subr.bf16.mxu0 0
        %830 = vmatpush1.bf16.msra.mxu0 0
        %831 = vmatprep.subr.bf16.mxu0 0
        %832 = vmatpush1.bf16.msra.mxu0 0
        %833 = vmatprep.subr.bf16.mxu0 0
        %834 = vmatpush1.bf16.msra.mxu0 0
        %835 = vmatprep.subr.bf16.mxu0 0
        %836 = vmatpush1.bf16.msra.mxu0 0
        %837 = vmatprep.subr.bf16.mxu0 0
        %838 = vmatpush1.bf16.msra.mxu0 0
        %839 = vmatprep.subr.bf16.mxu0 0
        %840 = vmatpush1.bf16.msra.mxu0 0
        %841 = vmatprep.subr.bf16.mxu0 0
        %842 = vmatpush1.bf16.msra.mxu0 0
        %843 = vmatprep.subr.bf16.mxu0 0
        %844 = vmatpush1.bf16.msra.mxu0 0
        %845 = vmatprep.subr.bf16.mxu0 0
        %846 = vmatpush1.bf16.msra.mxu0 0
        %847 = vmatprep.subr.bf16.mxu0 0
        %848 = vmatpush1.bf16.msra.mxu0 0
        %849 = vmatprep.subr.bf16.mxu0 0
        %850 = vmatpush1.bf16.msra.mxu0 0
        %851 = vmatprep.subr.bf16.mxu0 0
        %852 = vmatpush1.bf16.msra.mxu0 0
        %853 = vmatprep.subr.bf16.mxu0 0
        %854 = vmatpush1.bf16.msra.mxu0 0
        %855 = vmatprep.subr.bf16.mxu0 0
        %856 = vmatpush1.bf16.msra.mxu0 0
        %857 = vmatprep.mubr.bf16.mxu0 0
        %858 = vmatmul.mubr.bf16.gmra.mrb[0].mxu0 %v820
        %v859 = vpop.f32.mrb[0].mxu0
        %v860 = vadd.f32 0.0, %v859
        %v861 = vpop.f32.mrb[0].mxu0
        %v862 = vpop.f32.mrb[0].mxu0
        %v863 = vpop.f32.mrb[0].mxu0
        %864 = vdwg.mxu0
        %v865 = vpack.c.bf16 %v860, %v860
        %866 = vrot.lane.b32.xlu0 %v528, 104
        %v867 = vpop.permute.xlu0 %866
        %868 = vrot.lane.b32.xlu0 %v528, 72
        %v869 = vpop.permute.xlu0 %868
        %v871 = vsel %vm532, %v867, 0
        %v874 = vsel %vm532, %v869, 0
        %876 = vmatprep.subr.bf16.mxu0 0
        %877 = vmatpush1.bf16.xpose.msra.mxu0 %v874
        %878 = vmatprep.subr.bf16.mxu0 0
        %879 = vmatpush1.bf16.xpose.msra.mxu0 0
        %880 = vmatprep.subr.bf16.mxu0 0
        %881 = vmatpush1.bf16.xpose.msra.mxu0 0
        %882 = vmatprep.subr.bf16.mxu0 0
        %883 = vmatpush1.bf16.xpose.msra.mxu0 0
        %884 = vmatprep.subr.bf16.mxu0 0
        %885 = vmatpush1.bf16.xpose.msra.mxu0 0
        %886 = vmatprep.subr.bf16.mxu0 0
        %887 = vmatpush1.bf16.xpose.msra.mxu0 0
        %888 = vmatprep.subr.bf16.mxu0 0
        %889 = vmatpush1.bf16.xpose.msra.mxu0 0
        %890 = vmatprep.subr.bf16.mxu0 0
        %891 = vmatpush1.bf16.xpose.msra.mxu0 0
        %892 = vmatprep.subr.bf16.mxu0 0
        %893 = vmatpush1.bf16.xpose.msra.mxu0 0
        %894 = vmatprep.subr.bf16.mxu0 0
        %895 = vmatpush1.bf16.xpose.msra.mxu0 0
        %896 = vmatprep.subr.bf16.mxu0 0
        %897 = vmatpush1.bf16.xpose.msra.mxu0 0
        %898 = vmatprep.subr.bf16.mxu0 0
        %899 = vmatpush1.bf16.xpose.msra.mxu0 0
        %900 = vmatprep.subr.bf16.mxu0 0
        %901 = vmatpush1.bf16.xpose.msra.mxu0 0
        %902 = vmatprep.subr.bf16.mxu0 0
        %903 = vmatpush1.bf16.xpose.msra.mxu0 0
        %904 = vmatprep.subr.bf16.mxu0 0
        %905 = vmatpush1.bf16.xpose.msra.mxu0 0
        %906 = vmatprep.subr.bf16.mxu0 0
        %907 = vmatpush1.bf16.xpose.msra.mxu0 0
        %908 = vmatprep.mubr.bf16.mxu0 0
        %909 = vmatmul.mubr.bf16.gmra.mrb[0].mxu0 %v871
        %v910 = vpop.f32.mrb[0].mxu0
        %v911 = vadd.f32 0.0, %v910
        %v912 = vpop.f32.mrb[0].mxu0
        %v913 = vpop.f32.mrb[0].mxu0
        %v914 = vpop.f32.mrb[0].mxu0
        %915 = vdwg.mxu0
        %v916 = vmul.f32 %v911, 0.35355338
        %v917 = vsel %vm532, %v916, -inf
        %918 = vmax.xlane.f32.xlu0 %v917
        %v919 = vpop.xlane.xlu0 %918
        %v920 = vsub.f32 %v916, %v919
        %v921 = vmul.f32 %v920, 1.442695
        %v922 = vpow.pop %v921
        %v923 = vsel %vm532, %v922, 0.0
        %924 = vadd.xlane.f32.xlu0 %v923
        %v925 = vpop.xlane.xlu0 %924
        %v926 = vrcp.pop %v925
        %v927 = vmul.f32 %v922, %v926
        %v928 = vpack.c.bf16 %v927, %v927
        %929 = vrot.lane.b32.xlu0 %v528, 40
        %v930 = vpop.permute.xlu0 %929
        %v932 = vsel %vm532, %v928, 0
        %v935 = vsel %vm597, %v930, 0
        %937 = vmatprep.subr.bf16.mxu0 0
        %938 = vmatpush1.bf16.msra.mxu0 %v935
        %939 = vmatprep.subr.bf16.mxu0 0
        %940 = vmatpush1.bf16.msra.mxu0 0
        %941 = vmatprep.subr.bf16.mxu0 0
        %942 = vmatpush1.bf16.msra.mxu0 0
        %943 = vmatprep.subr.bf16.mxu0 0
        %944 = vmatpush1.bf16.msra.mxu0 0
        %945 = vmatprep.subr.bf16.mxu0 0
        %946 = vmatpush1.bf16.msra.mxu0 0
        %947 = vmatprep.subr.bf16.mxu0 0
        %948 = vmatpush1.bf16.msra.mxu0 0
        %949 = vmatprep.subr.bf16.mxu0 0
        %950 = vmatpush1.bf16.msra.mxu0 0
        %951 = vmatprep.subr.bf16.mxu0 0
        %952 = vmatpush1.bf16.msra.mxu0 0
        %953 = vmatprep.subr.bf16.mxu0 0
        %954 = vmatpush1.bf16.msra.mxu0 0
        %955 = vmatprep.subr.bf16.mxu0 0
        %956 = vmatpush1.bf16.msra.mxu0 0
        %957 = vmatprep.subr.bf16.mxu0 0
        %958 = vmatpush1.bf16.msra.mxu0 0
        %959 = vmatprep.subr.bf16.mxu0 0
        %960 = vmatpush1.bf16.msra.mxu0 0
        %961 = vmatprep.subr.bf16.mxu0 0
        %962 = vmatpush1.bf16.msra.mxu0 0
        %963 = vmatprep.subr.bf16.mxu0 0
        %964 = vmatpush1.bf16.msra.mxu0 0
        %965 = vmatprep.subr.bf16.mxu0 0
        %966 = vmatpush1.bf16.msra.mxu0 0
        %967 = vmatprep.subr.bf16.mxu0 0
        %968 = vmatpush1.bf16.msra.mxu0 0
        %969 = vmatprep.mubr.bf16.mxu0 0
        %970 = vmatmul.mubr.bf16.gmra.mrb[0].mxu0 %v932
        %v971 = vpop.f32.mrb[0].mxu0
        %v972 = vadd.f32 0.0, %v971
        %v973 = vpop.f32.mrb[0].mxu0
        %v974 = vpop.f32.mrb[0].mxu0
        %v975 = vpop.f32.mrb[0].mxu0
        %976 = vdwg.mxu0
        %v977 = vpack.c.bf16 %v972, %v972
        %979 = vrot.lane.b32.xlu0 %v753, 8
        %v980 = vpop.permute.xlu0 %979
        %982 = vrot.lane.b32.xlu0 %v865, 16
        %v983 = vpop.permute.xlu0 %982
        %985 = vrot.lane.b32.xlu0 %v977, 24
        %v986 = vpop.permute.xlu0 %985
        %v989 = vsel %vm532, %v641, %v980
        %vm990 = vcmask 130048
        %v992 = vsel %vm990, %v989, %v983
        %vm993 = vcmask 195584
        %v995 = vsel %vm993, %v992, %v986
        %vm997 = vcmask 257024
        %998 = vst.msk [vmem:[#allocation3] sm:$0xf] %vm997, %v995
        %v999 = vld [vmem:[#allocation2] sm:$0xf0]
        %v1001 = vrot.slane %v999, 4
        %1002 = vrot.lane.b32.xlu0 %v1001, 96
        %v1003 = vpop.permute.xlu0 %1002
        %v1005 = vsel %vm532, %v1001, 0
        %v1008 = vsel %vm532, %v1003, 0
        %1010 = vmatprep.subr.bf16.mxu0 0
        %1011 = vmatpush1.bf16.xpose.msra.mxu0 %v1008
        %1012 = vmatprep.subr.bf16.mxu0 0
        %1013 = vmatpush1.bf16.xpose.msra.mxu0 0
        %1014 = vmatprep.subr.bf16.mxu0 0
        %1015 = vmatpush1.bf16.xpose.msra.mxu0 0
        %1016 = vmatprep.subr.bf16.mxu0 0
        %1017 = vmatpush1.bf16.xpose.msra.mxu0 0
        %1018 = vmatprep.subr.bf16.mxu0 0
        %1019 = vmatpush1.bf16.xpose.msra.mxu0 0
        %1020 = vmatprep.subr.bf16.mxu0 0
        %1021 = vmatpush1.bf16.xpose.msra.mxu0 0
        %1022 = vmatprep.subr.bf16.mxu0 0
        %1023 = vmatpush1.bf16.xpose.msra.mxu0 0
        %1024 = vmatprep.subr.bf16.mxu0 0
        %1025 = vmatpush1.bf16.xpose.msra.mxu0 0
        %1026 = vmatprep.subr.bf16.mxu0 0
        %1027 = vmatpush1.bf16.xpose.msra.mxu0 0
        %1028 = vmatprep.subr.bf16.mxu0 0
        %1029 = vmatpush1.bf16.xpose.msra.mxu0 0
        %1030 = vmatprep.subr.bf16.mxu0 0
        %1031 = vmatpush1.bf16.xpose.msra.mxu0 0
        %1032 = vmatprep.subr.bf16.mxu0 0
        %1033 = vmatpush1.bf16.xpose.msra.mxu0 0
        %1034 = vmatprep.subr.bf16.mxu0 0
        %1035 = vmatpush1.bf16.xpose.msra.mxu0 0
        %1036 = vmatprep.subr.bf16.mxu0 0
        %1037 = vmatpush1.bf16.xpose.msra.mxu0 0
        %1038 = vmatprep.subr.bf16.mxu0 0
        %1039 = vmatpush1.bf16.xpose.msra.mxu0 0
        %1040 = vmatprep.subr.bf16.mxu0 0
        %1041 = vmatpush1.bf16.xpose.msra.mxu0 0
        %1042 = vmatprep.mubr.bf16.mxu0 0
        %1043 = vmatmul.mubr.bf16.gmra.mrb[0].mxu0 %v1005
        %v1044 = vpop.f32.mrb[0].mxu0
        %v1045 = vadd.f32 0.0, %v1044
        %v1046 = vpop.f32.mrb[0].mxu0
        %v1047 = vpop.f32.mrb[0].mxu0
        %v1048 = vpop.f32.mrb[0].mxu0
        %1049 = vdwg.mxu0
        %v1050 = vmul.f32 %v1045, 0.35355338
        %v1051 = vsel %vm532, %v1050, -inf
        %1052 = vmax.xlane.f32.xlu0 %v1051
        %v1053 = vpop.xlane.xlu0 %1052
        %v1054 = vsub.f32 %v1050, %v1053
        %v1055 = vmul.f32 %v1054, 1.442695
        %v1056 = vpow.pop %v1055
        %v1057 = vsel %vm532, %v1056, 0.0
        %1058 = vadd.xlane.f32.xlu0 %v1057
        %v1059 = vpop.xlane.xlu0 %1058
        %v1060 = vrcp.pop %v1059
        %v1061 = vmul.f32 %v1056, %v1060
        %v1062 = vpack.c.bf16 %v1061, %v1061
        %1063 = vrot.lane.b32.xlu0 %v1001, 64
        %v1064 = vpop.permute.xlu0 %1063
        %v1066 = vsel %vm532, %v1062, 0
        %v1069 = vsel %vm597, %v1064, 0
        %1071 = vmatprep.subr.bf16.mxu0 0
        %1072 = vmatpush1.bf16.msra.mxu0 %v1069
        %1073 = vmatprep.subr.bf16.mxu0 0
        %1074 = vmatpush1.bf16.msra.mxu0 0
        %1075 = vmatprep.subr.bf16.mxu0 0
        %1076 = vmatpush1.bf16.msra.mxu0 0
        %1077 = vmatprep.subr.bf16.mxu0 0
        %1078 = vmatpush1.bf16.msra.mxu0 0
        %1079 = vmatprep.subr.bf16.mxu0 0
        %1080 = vmatpush1.bf16.msra.mxu0 0
        %1081 = vmatprep.subr.bf16.mxu0 0
        %1082 = vmatpush1.bf16.msra.mxu0 0
        %1083 = vmatprep.subr.bf16.mxu0 0
        %1084 = vmatpush1.bf16.msra.mxu0 0
        %1085 = vmatprep.subr.bf16.mxu0 0
        %1086 = vmatpush1.bf16.msra.mxu0 0
        %1087 = vmatprep.subr.bf16.mxu0 0
        %1088 = vmatpush1.bf16.msra.mxu0 0
        %1089 = vmatprep.subr.bf16.mxu0 0
        %1090 = vmatpush1.bf16.msra.mxu0 0
        %1091 = vmatprep.subr.bf16.mxu0 0
        %1092 = vmatpush1.bf16.msra.mxu0 0
        %1093 = vmatprep.subr.bf16.mxu0 0
        %1094 = vmatpush1.bf16.msra.mxu0 0
        %1095 = vmatprep.subr.bf16.mxu0 0
        %1096 = vmatpush1.bf16.msra.mxu0 0
        %1097 = vmatprep.subr.bf16.mxu0 0
        %1098 = vmatpush1.bf16.msra.mxu0 0
        %1099 = vmatprep.subr.bf16.mxu0 0
        %1100 = vmatpush1.bf16.msra.mxu0 0
        %1101 = vmatprep.subr.bf16.mxu0 0
        %1102 = vmatpush1.bf16.msra.mxu0 0
        %1103 = vmatprep.mubr.bf16.mxu0 0
        %1104 = vmatmul.mubr.bf16.gmra.mrb[0].mxu0 %v1066
        %v1105 = vpop.f32.mrb[0].mxu0
        %v1106 = vadd.f32 0.0, %v1105
        %v1107 = vpop.f32.mrb[0].mxu0
        %v1108 = vpop.f32.mrb[0].mxu0
        %v1109 = vpop.f32.mrb[0].mxu0
        %1110 = vdwg.mxu0
        %v1111 = vpack.c.bf16 %v1106, %v1106
        %1112 = vrot.lane.b32.xlu0 %v1001, 120
        %v1113 = vpop.permute.xlu0 %1112
        %1114 = vrot.lane.b32.xlu0 %v1001, 88
        %v1115 = vpop.permute.xlu0 %1114
        %v1117 = vsel %vm532, %v1113, 0
        %v1120 = vsel %vm532, %v1115, 0
        %1122 = vmatprep.subr.bf16.mxu0 0
        %1123 = vmatpush1.bf16.xpose.msra.mxu0 %v1120
        %1124 = vmatprep.subr.bf16.mxu0 0
        %1125 = vmatpush1.bf16.xpose.msra.mxu0 0
        %1126 = vmatprep.subr.bf16.mxu0 0
        %1127 = vmatpush1.bf16.xpose.msra.mxu0 0
        %1128 = vmatprep.subr.bf16.mxu0 0
        %1129 = vmatpush1.bf16.xpose.msra.mxu0 0
        %1130 = vmatprep.subr.bf16.mxu0 0
        %1131 = vmatpush1.bf16.xpose.msra.mxu0 0
        %1132 = vmatprep.subr.bf16.mxu0 0
        %1133 = vmatpush1.bf16.xpose.msra.mxu0 0
        %1134 = vmatprep.subr.bf16.mxu0 0
        %1135 = vmatpush1.bf16.xpose.msra.mxu0 0
        %1136 = vmatprep.subr.bf16.mxu0 0
        %1137 = vmatpush1.bf16.xpose.msra.mxu0 0
        %1138 = vmatprep.subr.bf16.mxu0 0
        %1139 = vmatpush1.bf16.xpose.msra.mxu0 0
        %1140 = vmatprep.subr.bf16.mxu0 0
        %1141 = vmatpush1.bf16.xpose.msra.mxu0 0
        %1142 = vmatprep.subr.bf16.mxu0 0
        %1143 = vmatpush1.bf16.xpose.msra.mxu0 0
        %1144 = vmatprep.subr.bf16.mxu0 0
        %1145 = vmatpush1.bf16.xpose.msra.mxu0 0
        %1146 = vmatprep.subr.bf16.mxu0 0
        %1147 = vmatpush1.bf16.xpose.msra.mxu0 0
        %1148 = vmatprep.subr.bf16.mxu0 0
        %1149 = vmatpush1.bf16.xpose.msra.mxu0 0
        %1150 = vmatprep.subr.bf16.mxu0 0
        %1151 = vmatpush1.bf16.xpose.msra.mxu0 0
        %1152 = vmatprep.subr.bf16.mxu0 0
        %1153 = vmatpush1.bf16.xpose.msra.mxu0 0
        %1154 = vmatprep.mubr.bf16.mxu0 0
        %1155 = vmatmul.mubr.bf16.gmra.mrb[0].mxu0 %v1117
        %v1156 = vpop.f32.mrb[0].mxu0
        %v1157 = vadd.f32 0.0, %v1156
        %v1158 = vpop.f32.mrb[0].mxu0
        %v1159 = vpop.f32.mrb[0].mxu0
        %v1160 = vpop.f32.mrb[0].mxu0
        %1161 = vdwg.mxu0
        %v1162 = vmul.f32 %v1157, 0.35355338
        %v1163 = vsel %vm532, %v1162, -inf
        %1164 = vmax.xlane.f32.xlu0 %v1163
        %v1165 = vpop.xlane.xlu0 %1164
        %v1166 = vsub.f32 %v1162, %v1165
        %v1167 = vmul.f32 %v1166, 1.442695
        %v1168 = vpow.pop %v1167
        %v1169 = vsel %vm532, %v1168, 0.0
        %1170 = vadd.xlane.f32.xlu0 %v1169
        %v1171 = vpop.xlane.xlu0 %1170
        %v1172 = vrcp.pop %v1171
        %v1173 = vmul.f32 %v1168, %v1172
        %v1174 = vpack.c.bf16 %v1173, %v1173
        %1175 = vrot.lane.b32.xlu0 %v1001, 56
        %v1176 = vpop.permute.xlu0 %1175
        %v1178 = vsel %vm532, %v1174, 0
        %v1181 = vsel %vm597, %v1176, 0
        %1183 = vmatprep.subr.bf16.mxu0 0
        %1184 = vmatpush1.bf16.msra.mxu0 %v1181
        %1185 = vmatprep.subr.bf16.mxu0 0
        %1186 = vmatpush1.bf16.msra.mxu0 0
        %1187 = vmatprep.subr.bf16.mxu0 0
        %1188 = vmatpush1.bf16.msra.mxu0 0
        %1189 = vmatprep.subr.bf16.mxu0 0
        %1190 = vmatpush1.bf16.msra.mxu0 0
        %1191 = vmatprep.subr.bf16.mxu0 0
        %1192 = vmatpush1.bf16.msra.mxu0 0
        %1193 = vmatprep.subr.bf16.mxu0 0
        %1194 = vmatpush1.bf16.msra.mxu0 0
        %1195 = vmatprep.subr.bf16.mxu0 0
        %1196 = vmatpush1.bf16.msra.mxu0 0
        %1197 = vmatprep.subr.bf16.mxu0 0
        %1198 = vmatpush1.bf16.msra.mxu0 0
        %1199 = vmatprep.subr.bf16.mxu0 0
        %1200 = vmatpush1.bf16.msra.mxu0 0
        %1201 = vmatprep.subr.bf16.mxu0 0
        %1202 = vmatpush1.bf16.msra.mxu0 0
        %1203 = vmatprep.subr.bf16.mxu0 0
        %1204 = vmatpush1.bf16.msra.mxu0 0
        %1205 = vmatprep.subr.bf16.mxu0 0
        %1206 = vmatpush1.bf16.msra.mxu0 0
        %1207 = vmatprep.subr.bf16.mxu0 0
        %1208 = vmatpush1.bf16.msra.mxu0 0
        %1209 = vmatprep.subr.bf16.mxu0 0
        %1210 = vmatpush1.bf16.msra.mxu0 0
        %1211 = vmatprep.subr.bf16.mxu0 0
        %1212 = vmatpush1.bf16.msra.mxu0 0
        %1213 = vmatprep.subr.bf16.mxu0 0
        %1214 = vmatpush1.bf16.msra.mxu0 0
        %1215 = vmatprep.mubr.bf16.mxu0 0
        %1216 = vmatmul.mubr.bf16.gmra.mrb[0].mxu0 %v1178
        %v1217 = vpop.f32.mrb[0].mxu0
        %v1218 = vadd.f32 0.0, %v1217
        %v1219 = vpop.f32.mrb[0].mxu0
        %v1220 = vpop.f32.mrb[0].mxu0
        %v1221 = vpop.f32.mrb[0].mxu0
        %1222 = vdwg.mxu0
        %v1223 = vpack.c.bf16 %v1218, %v1218
        %1224 = vrot.lane.b32.xlu0 %v1001, 112
        %v1225 = vpop.permute.xlu0 %1224
        %1226 = vrot.lane.b32.xlu0 %v1001, 80
        %v1227 = vpop.permute.xlu0 %1226
        %v1229 = vsel %vm532, %v1225, 0
        %v1232 = vsel %vm532, %v1227, 0
        %1234 = vmatprep.subr.bf16.mxu0 0
        %1235 = vmatpush1.bf16.xpose.msra.mxu0 %v1232
        %1236 = vmatprep.subr.bf16.mxu0 0
        %1237 = vmatpush1.bf16.xpose.msra.mxu0 0
        %1238 = vmatprep.subr.bf16.mxu0 0
        %1239 = vmatpush1.bf16.xpose.msra.mxu0 0
        %1240 = vmatprep.subr.bf16.mxu0 0
        %1241 = vmatpush1.bf16.xpose.msra.mxu0 0
        %1242 = vmatprep.subr.bf16.mxu0 0
        %1243 = vmatpush1.bf16.xpose.msra.mxu0 0
        %1244 = vmatprep.subr.bf16.mxu0 0
        %1245 = vmatpush1.bf16.xpose.msra.mxu0 0
        %1246 = vmatprep.subr.bf16.mxu0 0
        %1247 = vmatpush1.bf16.xpose.msra.mxu0 0
        %1248 = vmatprep.subr.bf16.mxu0 0
        %1249 = vmatpush1.bf16.xpose.msra.mxu0 0
        %1250 = vmatprep.subr.bf16.mxu0 0
        %1251 = vmatpush1.bf16.xpose.msra.mxu0 0
        %1252 = vmatprep.subr.bf16.mxu0 0
        %1253 = vmatpush1.bf16.xpose.msra.mxu0 0
        %1254 = vmatprep.subr.bf16.mxu0 0
        %1255 = vmatpush1.bf16.xpose.msra.mxu0 0
        %1256 = vmatprep.subr.bf16.mxu0 0
        %1257 = vmatpush1.bf16.xpose.msra.mxu0 0
        %1258 = vmatprep.subr.bf16.mxu0 0
        %1259 = vmatpush1.bf16.xpose.msra.mxu0 0
        %1260 = vmatprep.subr.bf16.mxu0 0
        %1261 = vmatpush1.bf16.xpose.msra.mxu0 0
        %1262 = vmatprep.subr.bf16.mxu0 0
        %1263 = vmatpush1.bf16.xpose.msra.mxu0 0
        %1264 = vmatprep.subr.bf16.mxu0 0
        %1265 = vmatpush1.bf16.xpose.msra.mxu0 0
        %1266 = vmatprep.mubr.bf16.mxu0 0
        %1267 = vmatmul.mubr.bf16.gmra.mrb[0].mxu0 %v1229
        %v1268 = vpop.f32.mrb[0].mxu0
        %v1269 = vadd.f32 0.0, %v1268
        %v1270 = vpop.f32.mrb[0].mxu0
        %v1271 = vpop.f32.mrb[0].mxu0
        %v1272 = vpop.f32.mrb[0].mxu0
        %1273 = vdwg.mxu0
        %v1274 = vmul.f32 %v1269, 0.35355338
        %v1275 = vsel %vm532, %v1274, -inf
        %1276 = vmax.xlane.f32.xlu0 %v1275
        %v1277 = vpop.xlane.xlu0 %1276
        %v1278 = vsub.f32 %v1274, %v1277
        %v1279 = vmul.f32 %v1278, 1.442695
        %v1280 = vpow.pop %v1279
        %v1281 = vsel %vm532, %v1280, 0.0
        %1282 = vadd.xlane.f32.xlu0 %v1281
        %v1283 = vpop.xlane.xlu0 %1282
        %v1284 = vrcp.pop %v1283
        %v1285 = vmul.f32 %v1280, %v1284
        %v1286 = vpack.c.bf16 %v1285, %v1285
        %1287 = vrot.lane.b32.xlu0 %v1001, 48
        %v1288 = vpop.permute.xlu0 %1287
        %v1290 = vsel %vm532, %v1286, 0
        %v1293 = vsel %vm597, %v1288, 0
        %1295 = vmatprep.subr.bf16.mxu0 0
        %1296 = vmatpush1.bf16.msra.mxu0 %v1293
        %1297 = vmatprep.subr.bf16.mxu0 0
        %1298 = vmatpush1.bf16.msra.mxu0 0
        %1299 = vmatprep.subr.bf16.mxu0 0
        %1300 = vmatpush1.bf16.msra.mxu0 0
        %1301 = vmatprep.subr.bf16.mxu0 0
        %1302 = vmatpush1.bf16.msra.mxu0 0
        %1303 = vmatprep.subr.bf16.mxu0 0
        %1304 = vmatpush1.bf16.msra.mxu0 0
        %1305 = vmatprep.subr.bf16.mxu0 0
        %1306 = vmatpush1.bf16.msra.mxu0 0
        %1307 = vmatprep.subr.bf16.mxu0 0
        %1308 = vmatpush1.bf16.msra.mxu0 0
        %1309 = vmatprep.subr.bf16.mxu0 0
        %1310 = vmatpush1.bf16.msra.mxu0 0
        %1311 = vmatprep.subr.bf16.mxu0 0
        %1312 = vmatpush1.bf16.msra.mxu0 0
        %1313 = vmatprep.subr.bf16.mxu0 0
        %1314 = vmatpush1.bf16.msra.mxu0 0
        %1315 = vmatprep.subr.bf16.mxu0 0
        %1316 = vmatpush1.bf16.msra.mxu0 0
        %1317 = vmatprep.subr.bf16.mxu0 0
        %1318 = vmatpush1.bf16.msra.mxu0 0
        %1319 = vmatprep.subr.bf16.mxu0 0
        %1320 = vmatpush1.bf16.msra.mxu0 0
        %1321 = vmatprep.subr.bf16.mxu0 0
        %1322 = vmatpush1.bf16.msra.mxu0 0
        %1323 = vmatprep.subr.bf16.mxu0 0
        %1324 = vmatpush1.bf16.msra.mxu0 0
        %1325 = vmatprep.subr.bf16.mxu0 0
        %1326 = vmatpush1.bf16.msra.mxu0 0
        %1327 = vmatprep.mubr.bf16.mxu0 0
        %1328 = vmatmul.mubr.bf16.gmra.mrb[0].mxu0 %v1290
        %v1329 = vpop.f32.mrb[0].mxu0
        %v1330 = vadd.f32 0.0, %v1329
        %v1331 = vpop.f32.mrb[0].mxu0
        %v1332 = vpop.f32.mrb[0].mxu0
        %v1333 = vpop.f32.mrb[0].mxu0
        %1334 = vdwg.mxu0
        %v1335 = vpack.c.bf16 %v1330, %v1330
        %1336 = vrot.lane.b32.xlu0 %v1001, 104
        %v1337 = vpop.permute.xlu0 %1336
        %1338 = vrot.lane.b32.xlu0 %v1001, 72
        %v1339 = vpop.permute.xlu0 %1338
        %v1341 = vsel %vm532, %v1337, 0
        %v1344 = vsel %vm532, %v1339, 0
        %1346 = vmatprep.subr.bf16.mxu0 0
        %1347 = vmatpush1.bf16.xpose.msra.mxu0 %v1344
        %1348 = vmatprep.subr.bf16.mxu0 0
        %1349 = vmatpush1.bf16.xpose.msra.mxu0 0
        %1350 = vmatprep.subr.bf16.mxu0 0
        %1351 = vmatpush1.bf16.xpose.msra.mxu0 0
        %1352 = vmatprep.subr.bf16.mxu0 0
        %1353 = vmatpush1.bf16.xpose.msra.mxu0 0
        %1354 = vmatprep.subr.bf16.mxu0 0
        %1355 = vmatpush1.bf16.xpose.msra.mxu0 0
        %1356 = vmatprep.subr.bf16.mxu0 0
        %1357 = vmatpush1.bf16.xpose.msra.mxu0 0
        %1358 = vmatprep.subr.bf16.mxu0 0
        %1359 = vmatpush1.bf16.xpose.msra.mxu0 0
        %1360 = vmatprep.subr.bf16.mxu0 0
        %1361 = vmatpush1.bf16.xpose.msra.mxu0 0
        %1362 = vmatprep.subr.bf16.mxu0 0
        %1363 = vmatpush1.bf16.xpose.msra.mxu0 0
        %1364 = vmatprep.subr.bf16.mxu0 0
        %1365 = vmatpush1.bf16.xpose.msra.mxu0 0
        %1366 = vmatprep.subr.bf16.mxu0 0
        %1367 = vmatpush1.bf16.xpose.msra.mxu0 0
        %1368 = vmatprep.subr.bf16.mxu0 0
        %1369 = vmatpush1.bf16.xpose.msra.mxu0 0
        %1370 = vmatprep.subr.bf16.mxu0 0
        %1371 = vmatpush1.bf16.xpose.msra.mxu0 0
        %1372 = vmatprep.subr.bf16.mxu0 0
        %1373 = vmatpush1.bf16.xpose.msra.mxu0 0
        %1374 = vmatprep.subr.bf16.mxu0 0
        %1375 = vmatpush1.bf16.xpose.msra.mxu0 0
        %1376 = vmatprep.subr.bf16.mxu0 0
        %1377 = vmatpush1.bf16.xpose.msra.mxu0 0
        %1378 = vmatprep.mubr.bf16.mxu0 0
        %1379 = vmatmul.mubr.bf16.gmra.mrb[0].mxu0 %v1341
        %v1380 = vpop.f32.mrb[0].mxu0
        %v1381 = vadd.f32 0.0, %v1380
        %v1382 = vpop.f32.mrb[0].mxu0
        %v1383 = vpop.f32.mrb[0].mxu0
        %v1384 = vpop.f32.mrb[0].mxu0
        %1385 = vdwg.mxu0
        %v1386 = vmul.f32 %v1381, 0.35355338
        %v1387 = vsel %vm532, %v1386, -inf
        %1388 = vmax.xlane.f32.xlu0 %v1387
        %v1389 = vpop.xlane.xlu0 %1388
        %v1390 = vsub.f32 %v1386, %v1389
        %v1391 = vmul.f32 %v1390, 1.442695
        %v1392 = vpow.pop %v1391
        %v1393 = vsel %vm532, %v1392, 0.0
        %1394 = vadd.xlane.f32.xlu0 %v1393
        %v1395 = vpop.xlane.xlu0 %1394
        %v1396 = vrcp.pop %v1395
        %v1397 = vmul.f32 %v1392, %v1396
        %v1398 = vpack.c.bf16 %v1397, %v1397
        %1399 = vrot.lane.b32.xlu0 %v1001, 40
        %v1400 = vpop.permute.xlu0 %1399
        %v1402 = vsel %vm532, %v1398, 0
        %v1405 = vsel %vm597, %v1400, 0
        %1407 = vmatprep.subr.bf16.mxu0 0
        %1408 = vmatpush1.bf16.msra.mxu0 %v1405
        %1409 = vmatprep.subr.bf16.mxu0 0
        %1410 = vmatpush1.bf16.msra.mxu0 0
        %1411 = vmatprep.subr.bf16.mxu0 0
        %1412 = vmatpush1.bf16.msra.mxu0 0
        %1413 = vmatprep.subr.bf16.mxu0 0
        %1414 = vmatpush1.bf16.msra.mxu0 0
        %1415 = vmatprep.subr.bf16.mxu0 0
        %1416 = vmatpush1.bf16.msra.mxu0 0
        %1417 = vmatprep.subr.bf16.mxu0 0
        %1418 = vmatpush1.bf16.msra.mxu0 0
        %1419 = vmatprep.subr.bf16.mxu0 0
        %1420 = vmatpush1.bf16.msra.mxu0 0
        %1421 = vmatprep.subr.bf16.mxu0 0
        %1422 = vmatpush1.bf16.msra.mxu0 0
        %1423 = vmatprep.subr.bf16.mxu0 0
        %1424 = vmatpush1.bf16.msra.mxu0 0
        %1425 = vmatprep.subr.bf16.mxu0 0
        %1426 = vmatpush1.bf16.msra.mxu0 0
        %1427 = vmatprep.subr.bf16.mxu0 0
        %1428 = vmatpush1.bf16.msra.mxu0 0
        %1429 = vmatprep.subr.bf16.mxu0 0
        %1430 = vmatpush1.bf16.msra.mxu0 0
        %1431 = vmatprep.subr.bf16.mxu0 0
        %1432 = vmatpush1.bf16.msra.mxu0 0
        %1433 = vmatprep.subr.bf16.mxu0 0
        %1434 = vmatpush1.bf16.msra.mxu0 0
        %1435 = vmatprep.subr.bf16.mxu0 0
        %1436 = vmatpush1.bf16.msra.mxu0 0
        %1437 = vmatprep.subr.bf16.mxu0 0
        %1438 = vmatpush1.bf16.msra.mxu0 0
        %1439 = vmatprep.mubr.bf16.mxu0 0
        %1440 = vmatmul.mubr.bf16.gmra.mrb[0].mxu0 %v1402
        %v1441 = vpop.f32.mrb[0].mxu0
        %v1442 = vadd.f32 0.0, %v1441
        %v1443 = vpop.f32.mrb[0].mxu0
        %v1444 = vpop.f32.mrb[0].mxu0
        %v1445 = vpop.f32.mrb[0].mxu0
        %1446 = vdwg.mxu0
        %v1447 = vpack.c.bf16 %v1442, %v1442
        %1449 = vrot.lane.b32.xlu0 %v1223, 8
        %v1450 = vpop.permute.xlu0 %1449
        %1452 = vrot.lane.b32.xlu0 %v1335, 16
        %v1453 = vpop.permute.xlu0 %1452
        %1455 = vrot.lane.b32.xlu0 %v1447, 24
        %v1456 = vpop.permute.xlu0 %1455
        %v1459 = vsel %vm532, %v1111, %v1450
        %v1461 = vsel %vm990, %v1459, %v1453
        %v1463 = vsel %vm993, %v1461, %v1456
        %v1465 = vrot.slane %v1463, 4
        %vm1467 = vcmask 261124
        %1468 = vst.msk [vmem:[#allocation3] sm:$0xf0] %vm1467, %v1465
        %v1469 = vld [vmem:[%s412] sm:$0xff]
        %v1470 = vld [vmem:[%s412 + $0x8] sm:$0xff]
        %v1471 = vld [vmem:[#allocation3] sm:$0xff]
        %v1472 = vld [vmem:[%s4] sm:$0xf]
        %v1473 = vld [vmem:[%s4 + $0x4] sm:$0xf]
        %v1474 = vld [vmem:[%s4 + $0x8] sm:$0xf]
        %v1475 = vld [vmem:[%s4 + $0xc] sm:$0xf]
        %v1476 = vld [vmem:[%s5] sm:$0x1]
        %v1478 = vlaneseq
        %v1479 = vshrl.u32 %v1478, 7
        %v1480 = vsub.s32 0, %v1479
        %v1481 = vrot.slane %v1476, %v1480
        %v1487 = vunpack.c.l.b16 %v1472
        %v1488 = vunpack.c.l.b16 %v1473
        %v1489 = vunpack.c.l.b16 %v1474
        %v1490 = vunpack.c.l.b16 %v1475
        %v1491 = vpack.c.b16 %v1488, %v1487
        %v1492 = vpack.c.b16 %v1490, %v1489
        %v1496 = vsel %vm420, %v1471, 0
        %1498 = vmatprep.subr.bf16.mxu0 0
        %1499 = vmatpush1.bf16.msra.mxu0 %v1491
        %1500 = vmatprep.subr.bf16.mxu0 0
        %1501 = vmatpush1.bf16.msra.mxu0 %v1492
        %1502 = vmatprep.subr.bf16.mxu0 0
        %1503 = vmatpush1.bf16.msra.mxu0 0
        %1504 = vmatprep.subr.bf16.mxu0 0
        %1505 = vmatpush1.bf16.msra.mxu0 0
        %1506 = vmatprep.subr.bf16.mxu0 0
        %1507 = vmatpush1.bf16.msra.mxu0 0
        %1508 = vmatprep.subr.bf16.mxu0 0
        %1509 = vmatpush1.bf16.msra.mxu0 0
        %1510 = vmatprep.subr.bf16.mxu0 0
        %1511 = vmatpush1.bf16.msra.mxu0 0
        %1512 = vmatprep.subr.bf16.mxu0 0
        %1513 = vmatpush1.bf16.msra.mxu0 0
        %1514 = vmatprep.subr.bf16.mxu0 0
        %1515 = vmatpush1.bf16.msra.mxu0 0
        %1516 = vmatprep.subr.bf16.mxu0 0
        %1517 = vmatpush1.bf16.msra.mxu0 0
        %1518 = vmatprep.subr.bf16.mxu0 0
        %1519 = vmatpush1.bf16.msra.mxu0 0
        %1520 = vmatprep.subr.bf16.mxu0 0
        %1521 = vmatpush1.bf16.msra.mxu0 0
        %1522 = vmatprep.subr.bf16.mxu0 0
        %1523 = vmatpush1.bf16.msra.mxu0 0
        %1524 = vmatprep.subr.bf16.mxu0 0
        %1525 = vmatpush1.bf16.msra.mxu0 0
        %1526 = vmatprep.subr.bf16.mxu0 0
        %1527 = vmatpush1.bf16.msra.mxu0 0
        %1528 = vmatprep.subr.bf16.mxu0 0
        %1529 = vmatpush1.bf16.msra.mxu0 0
        %1530 = vmatprep.mubr.bf16.mxu0 0
        %1531 = vmatmul.mubr.bf16.gmra.mrb[0].mxu0 %v1496
        %v1532 = vpop.f32.mrb[0].mxu0
        %v1533 = vadd.f32 %v1481, %v1532
        %v1534 = vpop.f32.mrb[0].mxu0
        %v1535 = vpop.f32.mrb[0].mxu0
        %v1536 = vadd.f32 %v1481, %v1535
        %v1537 = vpop.f32.mrb[0].mxu0
        %1538 = vdwg.mxu0
        %v1539 = vadd.f32 %v1469, %v1533
        %v1540 = vadd.f32 %v1470, %v1536
        %v1541 = vld [vmem:[%s6] sm:$0x1]
        %v1542 = vld [vmem:[%s7] sm:$0x1]
        %v1543 = vsel %vm420, %v1539, 0.0
        %1544 = vadd.xlane.f32.xlu0 %v1543
        %v1545 = vpop.xlane.xlu0 %1544
        %v1546 = vsel %vm420, %v1540, 0.0
        %1547 = vadd.xlane.f32.xlu0 %v1546
        %v1548 = vpop.xlane.xlu0 %1547
        %v1549 = vmul.f32 %v1545, %v427
        %v1550 = vmul.f32 %v1548, %v427
        %v1551 = vsub.f32 %v1539, %v1549
        %v1552 = vsub.f32 %v1540, %v1550
        %v1553 = vmul.f32 %v1551, %v1551
        %v1554 = vmul.f32 %v1552, %v1552
        %v1555 = vsel %vm420, %v1553, 0.0
        %1556 = vadd.xlane.f32.xlu0 %v1555
        %v1557 = vpop.xlane.xlu0 %1556
        %v1558 = vsel %vm420, %v1554, 0.0
        %1559 = vadd.xlane.f32.xlu0 %v1558
        %v1560 = vpop.xlane.xlu0 %1559
        %v1561 = vmul.f32 %v1557, %v427
        %v1562 = vmul.f32 %v1560, %v427
        %v1563 = vadd.f32 %v1561, 1e-05
        %v1564 = vadd.f32 %v1562, 1e-05
        %v1565 = vrsqrt.pop %v1563
        %v1566 = vrsqrt.pop %v1564
        %v1567 = vmul.f32 %v1551, %v1565
        %v1568 = vmul.f32 %v1552, %v1566
        %v1570 = vlaneseq
        %v1571 = vshrl.u32 %v1570, 7
        %v1572 = vsub.s32 0, %v1571
        %v1573 = vrot.slane %v1541, %v1572
        %v1575 = vmul.f32 %v1567, %v1573
        %v1576 = vmul.f32 %v1568, %v1573
        %v1578 = vlaneseq
        %v1579 = vshrl.u32 %v1578, 7
        %v1580 = vsub.s32 0, %v1579
        %v1581 = vrot.slane %v1542, %v1580
        %v1583 = vadd.f32 %v1575, %v1581
        %v1584 = vadd.f32 %v1576, %v1581
        %v1585 = vpack.c.bf16 %v1584, %v1583
        %v1586 = vld [vmem:[%s8] sm:$0xf]
        %v1587 = vld [vmem:[%s8 + $0x4] sm:$0xf]
        %v1588 = vld [vmem:[%s8 + $0x8] sm:$0xf]
        %v1589 = vld [vmem:[%s8 + $0xc] sm:$0xf]
        %v1590 = vld [vmem:[%s9] sm:$0x1]
        %v1592 = vlaneseq
        %v1593 = vshrl.u32 %v1592, 7
        %v1594 = vsub.s32 0, %v1593
        %v1595 = vrot.slane %v1590, %v1594
        %v1601 = vunpack.c.l.b16 %v1586
        %v1602 = vunpack.c.l.b16 %v1587
        %v1603 = vunpack.c.l.b16 %v1588
        %v1604 = vunpack.c.l.b16 %v1589
        %v1605 = vpack.c.b16 %v1602, %v1601
        %v1606 = vpack.c.b16 %v1604, %v1603
        %v1610 = vsel %vm420, %v1585, 0
        %1612 = vmatprep.subr.bf16.mxu0 0
        %1613 = vmatpush1.bf16.msra.mxu0 %v1605
        %1614 = vmatprep.subr.bf16.mxu0 0
        %1615 = vmatpush1.bf16.msra.mxu0 %v1606
        %1616 = vmatprep.subr.bf16.mxu0 0
        %1617 = vmatpush1.bf16.msra.mxu0 0
        %1618 = vmatprep.subr.bf16.mxu0 0
        %1619 = vmatpush1.bf16.msra.mxu0 0
        %1620 = vmatprep.subr.bf16.mxu0 0
        %1621 = vmatpush1.bf16.msra.mxu0 0
        %1622 = vmatprep.subr.bf16.mxu0 0
        %1623 = vmatpush1.bf16.msra.mxu0 0
        %1624 = vmatprep.subr.bf16.mxu0 0
        %1625 = vmatpush1.bf16.msra.mxu0 0
        %1626 = vmatprep.subr.bf16.mxu0 0
        %1627 = vmatpush1.bf16.msra.mxu0 0
        %1628 = vmatprep.subr.bf16.mxu0 0
        %1629 = vmatpush1.bf16.msra.mxu0 0
        %1630 = vmatprep.subr.bf16.mxu0 0
        %1631 = vmatpush1.bf16.msra.mxu0 0
        %1632 = vmatprep.subr.bf16.mxu0 0
        %1633 = vmatpush1.bf16.msra.mxu0 0
        %1634 = vmatprep.subr.bf16.mxu0 0
        %1635 = vmatpush1.bf16.msra.mxu0 0
        %1636 = vmatprep.subr.bf16.mxu0 0
        %1637 = vmatpush1.bf16.msra.mxu0 0
        %1638 = vmatprep.subr.bf16.mxu0 0
        %1639 = vmatpush1.bf16.msra.mxu0 0
        %1640 = vmatprep.subr.bf16.mxu0 0
        %1641 = vmatpush1.bf16.msra.mxu0 0
        %1642 = vmatprep.subr.bf16.mxu0 0
        %1643 = vmatpush1.bf16.msra.mxu0 0
        %1644 = vmatprep.mubr.bf16.mxu0 0
        %1645 = vmatmul.mubr.bf16.gmra.mrb[0].mxu0 %v1610
        %v1646 = vpop.f32.mrb[0].mxu0
        %v1647 = vadd.f32 %v1595, %v1646
        %v1648 = vpop.f32.mrb[0].mxu0
        %v1649 = vpop.f32.mrb[0].mxu0
        %v1650 = vadd.f32 %v1595, %v1649
        %v1651 = vpop.f32.mrb[0].mxu0
        %1652 = vdwg.mxu0
        %v1653 = vmul.f32 %v1647, 0.5
        %v1654 = vmul.f32 %v1650, 0.5
        %v1655 = vmul.f32 %v1647, 0.70710677
        %v1656 = vmul.f32 %v1650, 0.70710677
        %v1657 = verf.f32.pop %v1655
        %v1658 = verf.f32.pop %v1656
        %v1659 = vadd.f32 %v1657, 1.0
        %v1660 = vadd.f32 %v1658, 1.0
        %v1661 = vmul.f32 %v1653, %v1659
        %v1662 = vmul.f32 %v1654, %v1660
        %v1663 = vpack.c.bf16 %v1662, %v1661
        %v1664 = vld [vmem:[%s10] sm:$0xf]
        %v1665 = vld [vmem:[%s10 + $0x4] sm:$0xf]
        %v1666 = vld [vmem:[%s10 + $0x8] sm:$0xf]
        %v1667 = vld [vmem:[%s10 + $0xc] sm:$0xf]
        %v1668 = vld [vmem:[%s10 + $0x10] sm:$0xf]
        %v1669 = vld [vmem:[%s10 + $0x14] sm:$0xf]
        %v1670 = vld [vmem:[%s10 + $0x18] sm:$0xf]
        %v1671 = vld [vmem:[%s10 + $0x1c] sm:$0xf]
        %v1672 = vld [vmem:[%s10 + $0x20] sm:$0xf]
        %v1673 = vld [vmem:[%s10 + $0x24] sm:$0xf]
        %v1674 = vld [vmem:[%s10 + $0x28] sm:$0xf]
        %v1675 = vld [vmem:[%s10 + $0x2c] sm:$0xf]
        %v1676 = vld [vmem:[%s10 + $0x30] sm:$0xf]
        %v1677 = vld [vmem:[%s10 + $0x34] sm:$0xf]
        %v1678 = vld [vmem:[%s10 + $0x38] sm:$0xf]
        %v1679 = vld [vmem:[%s10 + $0x3c] sm:$0xf]
        %v1680 = vld [vmem:[%s11] sm:$0x1]
        %v1682 = vlaneseq
        %v1683 = vshrl.u32 %v1682, 7
        %v1684 = vsub.s32 0, %v1683
        %v1685 = vrot.slane %v1680, %v1684
        %v1703 = vunpack.c.l.b16 %v1664
        %v1704 = vunpack.c.l.b16 %v1665
        %v1705 = vunpack.c.l.b16 %v1666
        %v1706 = vunpack.c.l.b16 %v1667
        %v1707 = vunpack.c.l.b16 %v1668
        %v1708 = vunpack.c.l.b16 %v1669
        %v1709 = vunpack.c.l.b16 %v1670
        %v1710 = vunpack.c.l.b16 %v1671
        %v1711 = vunpack.c.l.b16 %v1672
        %v1712 = vunpack.c.l.b16 %v1673
        %v1713 = vunpack.c.l.b16 %v1674
        %v1714 = vunpack.c.l.b16 %v1675
        %v1715 = vunpack.c.l.b16 %v1676
        %v1716 = vunpack.c.l.b16 %v1677
        %v1717 = vunpack.c.l.b16 %v1678
        %v1718 = vunpack.c.l.b16 %v1679
        %v1719 = vpack.c.b16 %v1704, %v1703
        %v1720 = vpack.c.b16 %v1706, %v1705
        %v1721 = vpack.c.b16 %v1708, %v1707
        %v1722 = vpack.c.b16 %v1710, %v1709
        %v1723 = vpack.c.b16 %v1712, %v1711
        %v1724 = vpack.c.b16 %v1714, %v1713
        %v1725 = vpack.c.b16 %v1716, %v1715
        %v1726 = vpack.c.b16 %v1718, %v1717
        %1735 = vmatprep.subr.bf16.mxu0 0
        %1736 = vmatpush1.bf16.msra.mxu0 %v1719
        %1737 = vmatprep.subr.bf16.mxu0 0
        %1738 = vmatpush1.bf16.msra.mxu0 %v1720
        %1739 = vmatprep.subr.bf16.mxu0 0
        %1740 = vmatpush1.bf16.msra.mxu0 %v1721
        %1741 = vmatprep.subr.bf16.mxu0 0
        %1742 = vmatpush1.bf16.msra.mxu0 %v1722
        %1743 = vmatprep.subr.bf16.mxu0 0
        %1744 = vmatpush1.bf16.msra.mxu0 %v1723
        %1745 = vmatprep.subr.bf16.mxu0 0
        %1746 = vmatpush1.bf16.msra.mxu0 %v1724
        %1747 = vmatprep.subr.bf16.mxu0 0
        %1748 = vmatpush1.bf16.msra.mxu0 %v1725
        %1749 = vmatprep.subr.bf16.mxu0 0
        %1750 = vmatpush1.bf16.msra.mxu0 %v1726
        %1751 = vmatprep.subr.bf16.mxu0 0
        %1752 = vmatpush1.bf16.msra.mxu0 0
        %1753 = vmatprep.subr.bf16.mxu0 0
        %1754 = vmatpush1.bf16.msra.mxu0 0
        %1755 = vmatprep.subr.bf16.mxu0 0
        %1756 = vmatpush1.bf16.msra.mxu0 0
        %1757 = vmatprep.subr.bf16.mxu0 0
        %1758 = vmatpush1.bf16.msra.mxu0 0
        %1759 = vmatprep.subr.bf16.mxu0 0
        %1760 = vmatpush1.bf16.msra.mxu0 0
        %1761 = vmatprep.subr.bf16.mxu0 0
        %1762 = vmatpush1.bf16.msra.mxu0 0
        %1763 = vmatprep.subr.bf16.mxu0 0
        %1764 = vmatpush1.bf16.msra.mxu0 0
        %1765 = vmatprep.subr.bf16.mxu0 0
        %1766 = vmatpush1.bf16.msra.mxu0 0
        %1767 = vmatprep.mubr.bf16.mxu0 0
        %1768 = vmatmul.mubr.bf16.gmra.mrb[0].mxu0 %v1663
        %v1769 = vpop.f32.mrb[0].mxu0
        %v1770 = vadd.f32 %v1685, %v1769
        %v1771 = vpop.f32.mrb[0].mxu0
        %v1772 = vpop.f32.mrb[0].mxu0
        %v1773 = vadd.f32 %v1685, %v1772
        %v1774 = vpop.f32.mrb[0].mxu0
        %1775 = vdwg.mxu0
        %v1776 = vadd.f32 %v1539, %v1770
        %v1777 = vadd.f32 %v1540, %v1773
        %1778 = vst.msk [vmem:[%s407] sm:$0xff] %vm420, %v1776
        %1779 = vst.msk [vmem:[%s407 + $0x8] sm:$0xff] %vm420, %v1777
        %s1780 = sand.u32 %s291, 1
        %s1781 = scalar_lea.sflag [#allocation5], %s1780
        %s1782 = sand.u32 %s291, 1
        %s1783 = smul.addr %s1782, 16
        %s1784 = scalar_lea.vmem [#allocation4], %s1783
        // Predicated region
        $region69: #{tpu_custom_call.1} parent=67 // pred_check
          %p1785 = pneg %p301
        $region70: #{tpu_custom_call.1} parent=67 // pred_check_branch
          %1787 = sbr.rel (%p1785) target = $region72
        $region71: #{tpu_custom_call.1} parent=67 // pred_region
          %s1788 = smul.u32 2, %s26
          %s1790 = ssub.s32 256, 256
          %1791 = vsyncadd %s1781, %s1790
          %s1792 = smul.addr %s1788, 128
          %s1793 = scalar_lea.hbm %s12, %s1792
          %s1794 = sshll.u32 %s1784, 4
          %s1795 = int_to_ptr.vmem [resolvable:$true] %s1794
          %1800 = dma.vmem_to_hbm [thread:$0]  %s1795, 256, %s1793, %s1781, 128, 128, 8
        $region72: #{tpu_custom_call.1} parent=67 // pred_fallthru
          _
      $region68: #{tpu_custom_call.1} parent=5 // pred_fallthru
        _
      %p1801 = scmp.le.s32.totalorder 2, %s21
      // Predicated region
      $region73: #{tpu_custom_call.1} parent=5 // pred_check
        %p1802 = pneg %p1801
      $region74: #{tpu_custom_call.1} parent=5 // pred_check_branch
        %1804 = sbr.rel (%p1802) target = $region76
      $region75: #{tpu_custom_call.1} parent=5 // pred_region
        %s1805 = ssub.s32 %s21, 2
        // Predicated region
        $region77: #{tpu_custom_call.1} parent=75 // pred_check
          %p1806 = pneg %p307
        $region78: #{tpu_custom_call.1} parent=75 // pred_check_branch
          %1808 = sbr.rel (%p1806) target = $region80
        $region79: #{tpu_custom_call.1} parent=75 // pred_region
          %s1809 = sand.u32 %s292, 1
          %s1810 = scalar_lea.sflag [#allocation5], %s1809
          %s1811 = sand.u32 %s292, 1
          %s1812 = smul.addr %s1811, 16
          %s1813 = scalar_lea.vmem [#allocation4], %s1812
          %1814 = dma.done %s1810, 256
        $region80: #{tpu_custom_call.1} parent=75 // pred_fallthru
          _
      $region76: #{tpu_custom_call.1} parent=5 // pred_fallthru
        _
    $region6: #{tpu_custom_call.1} parent=1 // loop_footer
      %s25 = sadd.s32 1, %s21
    $region7: #{tpu_custom_call.1} parent=1 // loop_footer_branch
      %20 = sbr.rel target = $region3
    $region8: #{tpu_custom_call.1} parent=1 // loop_exit
      _
    %1815 = vsyncpa [#allocation5], 1
    %s1816 = scalar_lea.sflag [#allocation5], 1
    %1817 = vsyncpa %s1816, 1

</llo_original>
